<compile_context>
chip_gen: v7x
topology: tpu7x:2x2x1
jax: 0.10.0
libtpu: 0.0.40
codegen_flags: <defaults>
</compile_context>

<pallas_src>
import jax
import jax.numpy as jnp
from jax import lax
from jax.experimental import pallas as pl
from jax.experimental.pallas import tpu as pltpu


def _gru_step(i_gates, h, w_hh, b_hh, H):
    """PyTorch-semantics GRU cell with fused [r|z|n] gate layout.

    i_gates: (N, 3H) precomputed  x @ W_ih + b_ih
    h:       (N, H)
    w_hh:    (H, 3H), b_hh: (N, 3H) pre-broadcast
    """
    hg = jnp.dot(h, w_hh, preferred_element_type=jnp.float32) + b_hh
    r = jax.nn.sigmoid(i_gates[:, 0:H] + hg[:, 0:H])
    z = jax.nn.sigmoid(i_gates[:, H:2 * H] + hg[:, H:2 * H])
    n = jnp.tanh(i_gates[:, 2 * H:] + r * hg[:, 2 * H:])
    return (1.0 - z) * n + z * h


def rnn_kernel(x_ref, e_ref,                              # (T,N,F), (T,N,E)
               w_px_ref, w_pe_ref, b_pre_ref,             # (F,H), (E,H), (1,H)
               w_ih_ref, b_ih_ref, w_hh_ref, b_hh_ref,    # (H,3H),(1,3H),(H,3H),(1,3H)
               w_hh_dec_ref, b_ih_dec_ref, b_hh_dec_ref,  # (H,3H),(1,3H),(1,3H)
               w_od_ref, b_od_ref,                        # (H,H), (1,H)
               w_out_ref, b_out_ref,                      # (H,OUT), (1,OUT)
               out_ref,                                   # (P, N, OUT)
               gates_ref,                                 # (T, N, 3H) f32 scratch
               hdec_ref):                                 # (P, N, H)  f32 scratch
    T, N, F = x_ref.shape
    E = e_ref.shape[2]
    H = w_hh_ref.shape[0]
    P, _, OUT = out_ref.shape
    H3 = 3 * H

    # --- Phase 1: batched input projection for ALL timesteps (off the
    #     recurrence critical path). ------------------------------------------
    x2 = x_ref[...].reshape(T * N, F)
    e2 = e_ref[...].reshape(T * N, E)
    pre = (jnp.dot(x2, w_px_ref[...], preferred_element_type=jnp.float32)
           + jnp.dot(e2, w_pe_ref[...], preferred_element_type=jnp.float32)
           + b_pre_ref[...])
    pre = jnp.maximum(pre, 0.0)                           # preprocess + ReLU
    ig = jnp.dot(pre, w_ih_ref[...], preferred_element_type=jnp.float32) + b_ih_ref[...]
    gates_ref[...] = ig.reshape(T, N, H3)

    # --- Phase 2: encoder recurrence (only h-dependent work). ----------------
    w_hh = w_hh_ref[...]                                  # (H, 3H)
    b_hh = jnp.broadcast_to(b_hh_ref[...], (N, H3))       # hoisted broadcast

    def enc_body(t, h):
        return _gru_step(gates_ref[t], h, w_hh, b_hh, H)

    h0 = jnp.zeros((N, H), jnp.float32)                   # PyTorch default h0
    h_enc = lax.fori_loop(0, T, enc_body, h0, unroll=True)

    # --- Phase 3: decoder recurrence, seeded with encoder end_state.
    #     Input is all zeros -> input projection == bias_ih only. -------------
    w_hh_d = w_hh_dec_ref[...]
    b_hh_d = jnp.broadcast_to(b_hh_dec_ref[...], (N, H3))
    i_dec = jnp.broadcast_to(b_ih_dec_ref[...], (N, H3))

    def dec_body(p, h):
        h_new = _gru_step(i_dec, h, w_hh_d, b_hh_d, H)
        hdec_ref[p] = h_new
        return h_new

    lax.fori_loop(0, P, dec_body, h_enc, unroll=True)

    # --- Phase 4: batched output head + one full-block store. ----------------
    hd = hdec_ref[...].reshape(P * N, H)
    od = jnp.dot(hd, w_od_ref[...], preferred_element_type=jnp.float32) + b_od_ref[...]
    od = jnp.maximum(od, 0.0)                             # output_decoder + ReLU
    y = jnp.dot(od, w_out_ref[...], preferred_element_type=jnp.float32) + b_out_ref[...]
    out_ref[...] = y.reshape(P, N, OUT).astype(out_ref.dtype)   # ouput_layer


def _pick_n_tile(N):
    """Largest tile <= 256 dividing N that is a multiple of 8; else full N."""
    for t in range(min(N, 256), 0, -1):
        if N % t == 0 and t % 8 == 0:
            return t
    return N


def convert_torch_params(tp, F):
    """PyTorch-layout params -> fused kernel layout ((in, out), gates [r|z|n])."""
    w_pre = tp["preprocess_w"].T                          # (D, H), D = F + E
    return dict(
        embed=tp["embed"],
        w_pre_x=w_pre[:F], w_pre_e=w_pre[F:], b_pre=tp["preprocess_b"][None, :],
        w_ih=tp["rnn_w_ih"].T, b_ih=tp["rnn_b_ih"][None, :],
        w_hh=tp["rnn_w_hh"].T, b_hh=tp["rnn_b_hh"][None, :],
        # decoder GRU(1, H): its input is identically zero in the reference
        # forward, so weight_ih_dec (3H, 1) never contributes and is dropped.
        w_hh_dec=tp["dec_w_hh"].T,
        b_ih_dec=tp["dec_b_ih"][None, :], b_hh_dec=tp["dec_b_hh"][None, :],
        w_od=tp["outdec_w"].T, b_od=tp["outdec_b"][None, :],
        w_out=tp["out_w"].T, b_out=tp["out_b"][None, :],
    )


def separated_rnn_forward(x, locations, params, prediction_length=3):
    """x: (B, T, L, F) float32, locations: (B, T, L) int32."""
    B, T, L, F = x.shape
    E = params["embed"].shape[1]
    H = params["w_hh"].shape[0]
    OUT = params["w_out"].shape[1]
    P = prediction_length
    N = B * L

    # TODO(synk): `rate = x[..., -1] - x[..., -2]` in the torch forward is dead
    # code (never used downstream) and is intentionally not computed.

    # Glue (plain JAX): embedding gather + time-major layout.  No concat copy:
    # the embedding stays a separate operand, w_pre is split in the kernel.
    loc_embeds = params["embed"][locations]                                # (B,T,L,E)
    x_tm = jnp.swapaxes(x, 1, 2).reshape(N, T, F).transpose(1, 0, 2)       # (T,N,F)
    e_tm = jnp.swapaxes(loc_embeds, 1, 2).reshape(N, T, E).transpose(1, 0, 2)

    n_tile = _pick_n_tile(N)
    grid = (N // n_tile,)

    def nmap(i):
        return (0, i, 0)

    def wmap(i):
        return (0, 0)

    weight_ops = [
        params["w_pre_x"], params["w_pre_e"], params["b_pre"],
        params["w_ih"], params["b_ih"], params["w_hh"], params["b_hh"],
        params["w_hh_dec"], params["b_ih_dec"], params["b_hh_dec"],
        params["w_od"], params["b_od"], params["w_out"], params["b_out"],
    ]
    in_specs = ([pl.BlockSpec((T, n_tile, F), nmap),
                 pl.BlockSpec((T, n_tile, E), nmap)]
                + [pl.BlockSpec(w.shape, wmap) for w in weight_ops])

    out = pl.pallas_call(
        rnn_kernel,
        grid=grid,
        in_specs=in_specs,
        out_specs=pl.BlockSpec((P, n_tile, OUT), nmap),
        out_shape=jax.ShapeDtypeStruct((P, N, OUT), jnp.float32),
        scratch_shapes=[
            pltpu.VMEM((T, n_tile, 3 * H), jnp.float32),   # precomputed input gates
            pltpu.VMEM((P, n_tile, H), jnp.float32),       # decoder hidden states
        ],
        compiler_params=pltpu.CompilerParams(
            dimension_semantics=("parallel",)),            # megacore over N tiles
    )(x_tm, e_tm, *weight_ops)                             # (P, N, OUT)

    # (P, N, OUT) -> (P, B, L, OUT) -> (B, P, L, OUT)  == torch output layout
    return jnp.transpose(out.reshape(P, B, L, OUT), (1, 0, 2, 3))


if __name__ == "__main__":
    # Small shapes consistent with the module's forward.
    B, T, L, F = 2, 8, 4, 5          # batch, time, locations, features in x
    NUM_LOCATIONS = 8                # embedding table rows
    E = 3                            # embed_dim
    H = 32                           # hidden_dim
    P = 3                            # prediction_length
    OUT = 2                          # output_dim
    D = F + E                        # preprocess input dim
    # (In torch terms: input_feature_dim = F + n_ar_columns so that
    #  init_dim = input_feature_dim + embed_dim - n_ar_columns = F + 3 = D.)

    key = jax.random.PRNGKey(0)
    keys = jax.random.split(key, 16)

    def w(k, shape, scale=0.1):
        return (scale * jax.random.normal(k, shape)).astype(jnp.float32)

    torch_params = dict(
        embed=w(keys[0], (NUM_LOCATIONS, E)),
        preprocess_w=w(keys[1], (H, D)), preprocess_b=w(keys[2], (H,)),
        # GRU weights in PyTorch layout: (3H, in), gate order [r, z, n]
        rnn_w_ih=w(keys[3], (3 * H, H)), rnn_w_hh=w(keys[4], (3 * H, H)),
        rnn_b_ih=w(keys[5], (3 * H,)), rnn_b_hh=w(keys[6], (3 * H,)),
        dec_w_hh=w(keys[7], (3 * H, H)),
        dec_b_ih=w(keys[8], (3 * H,)), dec_b_hh=w(keys[9], (3 * H,)),
        outdec_w=w(keys[10], (H, H)), outdec_b=w(keys[11], (H,)),
        out_w=w(keys[12], (OUT, H)), out_b=w(keys[13], (OUT,)),
    )
    params = convert_torch_params(torch_params, F)

    x = jax.random.normal(keys[14], (B, T, L, F), dtype=jnp.float32)
    locations = jax.random.randint(keys[15], (B, T, L), 0, NUM_LOCATIONS,
                                   dtype=jnp.int32)

    out = separated_rnn_forward(x, locations, params, prediction_length=P)
    out = jax.block_until_ready(out)
    assert out.shape == (B, P, L, OUT), out.shape
    assert jnp.all(jnp.isfinite(out))
    print("KERNEL_OK")
</pallas_src>

<mosaic_0001>
module attributes {stable_mosaic.version = 11 : i64} {
  func.func @rnn_kernel(%arg0: i32, %arg1: memref<8x8x5xf32, #tpu.memory_space<vmem>>, %arg2: memref<8x8x3xf32, #tpu.memory_space<vmem>>, %arg3: memref<5x32xf32, #tpu.memory_space<vmem>>, %arg4: memref<3x32xf32, #tpu.memory_space<vmem>>, %arg5: memref<1x32xf32, #tpu.memory_space<vmem>>, %arg6: memref<32x96xf32, #tpu.memory_space<vmem>>, %arg7: memref<1x96xf32, #tpu.memory_space<vmem>>, %arg8: memref<32x96xf32, #tpu.memory_space<vmem>>, %arg9: memref<1x96xf32, #tpu.memory_space<vmem>>, %arg10: memref<32x96xf32, #tpu.memory_space<vmem>>, %arg11: memref<1x96xf32, #tpu.memory_space<vmem>>, %arg12: memref<1x96xf32, #tpu.memory_space<vmem>>, %arg13: memref<32x32xf32, #tpu.memory_space<vmem>>, %arg14: memref<1x32xf32, #tpu.memory_space<vmem>>, %arg15: memref<32x2xf32, #tpu.memory_space<vmem>>, %arg16: memref<1x2xf32, #tpu.memory_space<vmem>>, %arg17: memref<3x8x2xf32, #tpu.memory_space<vmem>>, %arg18: memref<8x8x96xf32, #tpu.memory_space<vmem>>, %arg19: memref<3x8x32xf32, #tpu.memory_space<vmem>>) attributes {dimension_semantics = [#tpu.dimension_semantics<parallel>], iteration_bounds = array<i64: 1>, scalar_prefetch = 0 : i64, scratch_operands = 2 : i64, tpu.core_type = #tpu.core_type<tc>, window_params = [{transform_indices = @transform_0, window_bounds = array<i64: 8, 8, 5>}, {transform_indices = @transform_1, window_bounds = array<i64: 8, 8, 3>}, {pipeline_mode = #tpu.pipeline_mode<synchronous>, transform_indices = @transform_2, window_bounds = array<i64: 5, 32>}, {pipeline_mode = #tpu.pipeline_mode<synchronous>, transform_indices = @transform_3, window_bounds = array<i64: 3, 32>}, {pipeline_mode = #tpu.pipeline_mode<synchronous>, transform_indices = @transform_4, window_bounds = array<i64: 1, 32>}, {pipeline_mode = #tpu.pipeline_mode<synchronous>, transform_indices = @transform_5, window_bounds = array<i64: 32, 96>}, {pipeline_mode = #tpu.pipeline_mode<synchronous>, transform_indices = @transform_6, window_bounds = array<i64: 1, 96>}, {pipeline_mode = #tpu.pipeline_mode<synchronous>, transform_indices = @transform_7, window_bounds = array<i64: 32, 96>}, {pipeline_mode = #tpu.pipeline_mode<synchronous>, transform_indices = @transform_8, window_bounds = array<i64: 1, 96>}, {pipeline_mode = #tpu.pipeline_mode<synchronous>, transform_indices = @transform_9, window_bounds = array<i64: 32, 96>}, {pipeline_mode = #tpu.pipeline_mode<synchronous>, transform_indices = @transform_10, window_bounds = array<i64: 1, 96>}, {pipeline_mode = #tpu.pipeline_mode<synchronous>, transform_indices = @transform_11, window_bounds = array<i64: 1, 96>}, {pipeline_mode = #tpu.pipeline_mode<synchronous>, transform_indices = @transform_12, window_bounds = array<i64: 32, 32>}, {pipeline_mode = #tpu.pipeline_mode<synchronous>, transform_indices = @transform_13, window_bounds = array<i64: 1, 32>}, {pipeline_mode = #tpu.pipeline_mode<synchronous>, transform_indices = @transform_14, window_bounds = array<i64: 32, 2>}, {pipeline_mode = #tpu.pipeline_mode<synchronous>, transform_indices = @transform_15, window_bounds = array<i64: 1, 2>}, {transform_indices = @transform_16, window_bounds = array<i64: 3, 8, 2>}]} {
    %c0 = arith.constant 0 : index
    %c0_0 = arith.constant 0 : index
    %c0_1 = arith.constant 0 : index
    %0 = vector.load %arg1[%c0, %c0_0, %c0_1] : memref<8x8x5xf32, #tpu.memory_space<vmem>>, vector<8x8x5xf32>
    %1 = vector.shape_cast %0 : vector<8x8x5xf32> to vector<64x5xf32>
    %c0_2 = arith.constant 0 : index
    %c0_3 = arith.constant 0 : index
    %c0_4 = arith.constant 0 : index
    %2 = vector.load %arg2[%c0_2, %c0_3, %c0_4] : memref<8x8x3xf32, #tpu.memory_space<vmem>>, vector<8x8x3xf32>
    %3 = vector.shape_cast %2 : vector<8x8x3xf32> to vector<64x3xf32>
    %c0_5 = arith.constant 0 : index
    %c0_6 = arith.constant 0 : index
    %4 = vector.load %arg3[%c0_5, %c0_6] : memref<5x32xf32, #tpu.memory_space<vmem>>, vector<5x32xf32>
    %cst = arith.constant dense<0.000000e+00> : vector<64x32xf32>
    %5 = tpu.matmul %1, %4, %cst {dimension_numbers = #tpu.dot_dimension_numbers<[1], [0], [0], [1], [0, 0, 1, 1], [], []>} : vector<64x5xf32>, vector<5x32xf32>, vector<64x32xf32> -> vector<64x32xf32>
    %c0_7 = arith.constant 0 : index
    %c0_8 = arith.constant 0 : index
    %6 = vector.load %arg4[%c0_7, %c0_8] : memref<3x32xf32, #tpu.memory_space<vmem>>, vector<3x32xf32>
    %cst_9 = arith.constant dense<0.000000e+00> : vector<64x32xf32>
    %7 = tpu.matmul %3, %6, %cst_9 {dimension_numbers = #tpu.dot_dimension_numbers<[1], [0], [0], [1], [0, 0, 1, 1], [], []>} : vector<64x3xf32>, vector<3x32xf32>, vector<64x32xf32> -> vector<64x32xf32>
    %8 = arith.addf %5, %7 : vector<64x32xf32>
    %c0_10 = arith.constant 0 : index
    %c0_11 = arith.constant 0 : index
    %9 = vector.load %arg5[%c0_10, %c0_11] : memref<1x32xf32, #tpu.memory_space<vmem>>, vector<1x32xf32>
    %10 = vector.broadcast %9 : vector<1x32xf32> to vector<64x32xf32>
    %11 = arith.addf %8, %10 : vector<64x32xf32>
    %cst_12 = arith.constant 0.000000e+00 : f32
    %12 = vector.broadcast %cst_12 : f32 to vector<64x32xf32>
    %13 = arith.maximumf %11, %12 : vector<64x32xf32>
    %c0_13 = arith.constant 0 : index
    %c0_14 = arith.constant 0 : index
    %14 = vector.load %arg6[%c0_13, %c0_14] : memref<32x96xf32, #tpu.memory_space<vmem>>, vector<32x96xf32>
    %cst_15 = arith.constant dense<0.000000e+00> : vector<64x96xf32>
    %15 = tpu.matmul %13, %14, %cst_15 {dimension_numbers = #tpu.dot_dimension_numbers<[1], [0], [0], [1], [0, 0, 1, 1], [], []>} : vector<64x32xf32>, vector<32x96xf32>, vector<64x96xf32> -> vector<64x96xf32>
    %c0_16 = arith.constant 0 : index
    %c0_17 = arith.constant 0 : index
    %16 = vector.load %arg7[%c0_16, %c0_17] : memref<1x96xf32, #tpu.memory_space<vmem>>, vector<1x96xf32>
    %17 = vector.broadcast %16 : vector<1x96xf32> to vector<64x96xf32>
    %18 = arith.addf %15, %17 : vector<64x96xf32>
    %19 = vector.shape_cast %18 : vector<64x96xf32> to vector<8x8x96xf32>
    %c0_18 = arith.constant 0 : index
    %c0_19 = arith.constant 0 : index
    %c0_20 = arith.constant 0 : index
    %20 = vector.load %arg18[%c0_18, %c0_19, %c0_20] : memref<8x8x96xf32, #tpu.memory_space<vmem>>, vector<8x8x96xf32>
    tpu.vector_store %arg18[%c0_18, %c0_19, %c0_20], %19 {strides = array<i32>} : memref<8x8x96xf32, #tpu.memory_space<vmem>>, vector<8x8x96xf32>,
    %c0_21 = arith.constant 0 : index
    %c0_22 = arith.constant 0 : index
    %21 = vector.load %arg8[%c0_21, %c0_22] : memref<32x96xf32, #tpu.memory_space<vmem>>, vector<32x96xf32>
    %c0_23 = arith.constant 0 : index
    %c0_24 = arith.constant 0 : index
    %22 = vector.load %arg9[%c0_23, %c0_24] : memref<1x96xf32, #tpu.memory_space<vmem>>, vector<1x96xf32>
    %23 = vector.shape_cast %22 : vector<1x96xf32> to vector<1x96xf32>
    %24 = vector.broadcast %23 : vector<1x96xf32> to vector<8x96xf32>
    %cst_25 = arith.constant 0.000000e+00 : f32
    %25 = vector.broadcast %cst_25 : f32 to vector<8x32xf32>
    %c0_i32 = arith.constant 0 : i32
    %26 = arith.index_cast %c0_i32 : i32 to index
    %c0_26 = arith.constant 0 : index
    %c0_27 = arith.constant 0 : index
    %27 = vector.load %arg18[%26, %c0_26, %c0_27] : memref<8x8x96xf32, #tpu.memory_space<vmem>>, vector<1x8x96xf32>
    %28 = vector.shape_cast %27 : vector<1x8x96xf32> to vector<8x96xf32>
    %cst_28 = arith.constant dense<0.000000e+00> : vector<8x96xf32>
    %29 = tpu.matmul %25, %21, %cst_28 {dimension_numbers = #tpu.dot_dimension_numbers<[1], [0], [0], [1], [0, 0, 1, 1], [], []>} : vector<8x32xf32>, vector<32x96xf32>, vector<8x96xf32> -> vector<8x96xf32>
    %30 = arith.addf %29, %24 : vector<8x96xf32>
    %31 = vector.extract_strided_slice %28 {offsets = [0, 0], sizes = [8, 32], strides = [1, 1]} : vector<8x96xf32> to vector<8x32xf32>
    %32 = vector.extract_strided_slice %30 {offsets = [0, 0], sizes = [8, 32], strides = [1, 1]} : vector<8x96xf32> to vector<8x32xf32>
    %33 = arith.addf %31, %32 : vector<8x32xf32>
    %34 = arith.negf %33 : vector<8x32xf32>
    %35 = math.exp %34 : vector<8x32xf32>
    %cst_29 = arith.constant 1.000000e+00 : f32
    %36 = vector.broadcast %cst_29 : f32 to vector<8x32xf32>
    %37 = arith.addf %36, %35 : vector<8x32xf32>
    %38 = arith.divf %36, %37 : vector<8x32xf32>
    %39 = vector.extract_strided_slice %28 {offsets = [0, 32], sizes = [8, 32], strides = [1, 1]} : vector<8x96xf32> to vector<8x32xf32>
    %40 = vector.extract_strided_slice %30 {offsets = [0, 32], sizes = [8, 32], strides = [1, 1]} : vector<8x96xf32> to vector<8x32xf32>
    %41 = arith.addf %39, %40 : vector<8x32xf32>
    %42 = arith.negf %41 : vector<8x32xf32>
    %43 = math.exp %42 : vector<8x32xf32>
    %cst_30 = arith.constant 1.000000e+00 : f32
    %44 = vector.broadcast %cst_30 : f32 to vector<8x32xf32>
    %45 = arith.addf %44, %43 : vector<8x32xf32>
    %46 = arith.divf %44, %45 : vector<8x32xf32>
    %47 = vector.extract_strided_slice %28 {offsets = [0, 64], sizes = [8, 32], strides = [1, 1]} : vector<8x96xf32> to vector<8x32xf32>
    %48 = vector.extract_strided_slice %30 {offsets = [0, 64], sizes = [8, 32], strides = [1, 1]} : vector<8x96xf32> to vector<8x32xf32>
    %49 = arith.mulf %38, %48 : vector<8x32xf32>
    %50 = arith.addf %47, %49 : vector<8x32xf32>
    %51 = math.tanh %50 : vector<8x32xf32>
    %cst_31 = arith.constant 1.000000e+00 : f32
    %52 = vector.broadcast %cst_31 : f32 to vector<8x32xf32>
    %53 = arith.subf %52, %46 : vector<8x32xf32>
    %54 = arith.mulf %53, %51 : vector<8x32xf32>
    %55 = arith.mulf %46, %25 : vector<8x32xf32>
    %56 = arith.addf %54, %55 : vector<8x32xf32>
    %c1_i32 = arith.constant 1 : i32
    %57 = arith.index_cast %c1_i32 : i32 to index
    %c0_32 = arith.constant 0 : index
    %c0_33 = arith.constant 0 : index
    %58 = vector.load %arg18[%57, %c0_32, %c0_33] : memref<8x8x96xf32, #tpu.memory_space<vmem>>, vector<1x8x96xf32>
    %59 = vector.shape_cast %58 : vector<1x8x96xf32> to vector<8x96xf32>
    %cst_34 = arith.constant dense<0.000000e+00> : vector<8x96xf32>
    %60 = tpu.matmul %56, %21, %cst_34 {dimension_numbers = #tpu.dot_dimension_numbers<[1], [0], [0], [1], [0, 0, 1, 1], [], []>} : vector<8x32xf32>, vector<32x96xf32>, vector<8x96xf32> -> vector<8x96xf32>
    %61 = arith.addf %60, %24 : vector<8x96xf32>
    %62 = vector.extract_strided_slice %59 {offsets = [0, 0], sizes = [8, 32], strides = [1, 1]} : vector<8x96xf32> to vector<8x32xf32>
    %63 = vector.extract_strided_slice %61 {offsets = [0, 0], sizes = [8, 32], strides = [1, 1]} : vector<8x96xf32> to vector<8x32xf32>
    %64 = arith.addf %62, %63 : vector<8x32xf32>
    %65 = arith.negf %64 : vector<8x32xf32>
    %66 = math.exp %65 : vector<8x32xf32>
    %cst_35 = arith.constant 1.000000e+00 : f32
    %67 = vector.broadcast %cst_35 : f32 to vector<8x32xf32>
    %68 = arith.addf %67, %66 : vector<8x32xf32>
    %69 = arith.divf %67, %68 : vector<8x32xf32>
    %70 = vector.extract_strided_slice %59 {offsets = [0, 32], sizes = [8, 32], strides = [1, 1]} : vector<8x96xf32> to vector<8x32xf32>
    %71 = vector.extract_strided_slice %61 {offsets = [0, 32], sizes = [8, 32], strides = [1, 1]} : vector<8x96xf32> to vector<8x32xf32>
    %72 = arith.addf %70, %71 : vector<8x32xf32>
    %73 = arith.negf %72 : vector<8x32xf32>
    %74 = math.exp %73 : vector<8x32xf32>
    %cst_36 = arith.constant 1.000000e+00 : f32
    %75 = vector.broadcast %cst_36 : f32 to vector<8x32xf32>
    %76 = arith.addf %75, %74 : vector<8x32xf32>
    %77 = arith.divf %75, %76 : vector<8x32xf32>
    %78 = vector.extract_strided_slice %59 {offsets = [0, 64], sizes = [8, 32], strides = [1, 1]} : vector<8x96xf32> to vector<8x32xf32>
    %79 = vector.extract_strided_slice %61 {offsets = [0, 64], sizes = [8, 32], strides = [1, 1]} : vector<8x96xf32> to vector<8x32xf32>
    %80 = arith.mulf %69, %79 : vector<8x32xf32>
    %81 = arith.addf %78, %80 : vector<8x32xf32>
    %82 = math.tanh %81 : vector<8x32xf32>
    %cst_37 = arith.constant 1.000000e+00 : f32
    %83 = vector.broadcast %cst_37 : f32 to vector<8x32xf32>
    %84 = arith.subf %83, %77 : vector<8x32xf32>
    %85 = arith.mulf %84, %82 : vector<8x32xf32>
    %86 = arith.mulf %77, %56 : vector<8x32xf32>
    %87 = arith.addf %85, %86 : vector<8x32xf32>
    %c2_i32 = arith.constant 2 : i32
    %88 = arith.index_cast %c2_i32 : i32 to index
    %c0_38 = arith.constant 0 : index
    %c0_39 = arith.constant 0 : index
    %89 = vector.load %arg18[%88, %c0_38, %c0_39] : memref<8x8x96xf32, #tpu.memory_space<vmem>>, vector<1x8x96xf32>
    %90 = vector.shape_cast %89 : vector<1x8x96xf32> to vector<8x96xf32>
    %cst_40 = arith.constant dense<0.000000e+00> : vector<8x96xf32>
    %91 = tpu.matmul %87, %21, %cst_40 {dimension_numbers = #tpu.dot_dimension_numbers<[1], [0], [0], [1], [0, 0, 1, 1], [], []>} : vector<8x32xf32>, vector<32x96xf32>, vector<8x96xf32> -> vector<8x96xf32>
    %92 = arith.addf %91, %24 : vector<8x96xf32>
    %93 = vector.extract_strided_slice %90 {offsets = [0, 0], sizes = [8, 32], strides = [1, 1]} : vector<8x96xf32> to vector<8x32xf32>
    %94 = vector.extract_strided_slice %92 {offsets = [0, 0], sizes = [8, 32], strides = [1, 1]} : vector<8x96xf32> to vector<8x32xf32>
    %95 = arith.addf %93, %94 : vector<8x32xf32>
    %96 = arith.negf %95 : vector<8x32xf32>
    %97 = math.exp %96 : vector<8x32xf32>
    %cst_41 = arith.constant 1.000000e+00 : f32
    %98 = vector.broadcast %cst_41 : f32 to vector<8x32xf32>
    %99 = arith.addf %98, %97 : vector<8x32xf32>
    %100 = arith.divf %98, %99 : vector<8x32xf32>
    %101 = vector.extract_strided_slice %90 {offsets = [0, 32], sizes = [8, 32], strides = [1, 1]} : vector<8x96xf32> to vector<8x32xf32>
    %102 = vector.extract_strided_slice %92 {offsets = [0, 32], sizes = [8, 32], strides = [1, 1]} : vector<8x96xf32> to vector<8x32xf32>
    %103 = arith.addf %101, %102 : vector<8x32xf32>
    %104 = arith.negf %103 : vector<8x32xf32>
    %105 = math.exp %104 : vector<8x32xf32>
    %cst_42 = arith.constant 1.000000e+00 : f32
    %106 = vector.broadcast %cst_42 : f32 to vector<8x32xf32>
    %107 = arith.addf %106, %105 : vector<8x32xf32>
    %108 = arith.divf %106, %107 : vector<8x32xf32>
    %109 = vector.extract_strided_slice %90 {offsets = [0, 64], sizes = [8, 32], strides = [1, 1]} : vector<8x96xf32> to vector<8x32xf32>
    %110 = vector.extract_strided_slice %92 {offsets = [0, 64], sizes = [8, 32], strides = [1, 1]} : vector<8x96xf32> to vector<8x32xf32>
    %111 = arith.mulf %100, %110 : vector<8x32xf32>
    %112 = arith.addf %109, %111 : vector<8x32xf32>
    %113 = math.tanh %112 : vector<8x32xf32>
    %cst_43 = arith.constant 1.000000e+00 : f32
    %114 = vector.broadcast %cst_43 : f32 to vector<8x32xf32>
    %115 = arith.subf %114, %108 : vector<8x32xf32>
    %116 = arith.mulf %115, %113 : vector<8x32xf32>
    %117 = arith.mulf %108, %87 : vector<8x32xf32>
    %118 = arith.addf %116, %117 : vector<8x32xf32>
    %c3_i32 = arith.constant 3 : i32
    %119 = arith.index_cast %c3_i32 : i32 to index
    %c0_44 = arith.constant 0 : index
    %c0_45 = arith.constant 0 : index
    %120 = vector.load %arg18[%119, %c0_44, %c0_45] : memref<8x8x96xf32, #tpu.memory_space<vmem>>, vector<1x8x96xf32>
    %121 = vector.shape_cast %120 : vector<1x8x96xf32> to vector<8x96xf32>
    %cst_46 = arith.constant dense<0.000000e+00> : vector<8x96xf32>
    %122 = tpu.matmul %118, %21, %cst_46 {dimension_numbers = #tpu.dot_dimension_numbers<[1], [0], [0], [1], [0, 0, 1, 1], [], []>} : vector<8x32xf32>, vector<32x96xf32>, vector<8x96xf32> -> vector<8x96xf32>
    %123 = arith.addf %122, %24 : vector<8x96xf32>
    %124 = vector.extract_strided_slice %121 {offsets = [0, 0], sizes = [8, 32], strides = [1, 1]} : vector<8x96xf32> to vector<8x32xf32>
    %125 = vector.extract_strided_slice %123 {offsets = [0, 0], sizes = [8, 32], strides = [1, 1]} : vector<8x96xf32> to vector<8x32xf32>
    %126 = arith.addf %124, %125 : vector<8x32xf32>
    %127 = arith.negf %126 : vector<8x32xf32>
    %128 = math.exp %127 : vector<8x32xf32>
    %cst_47 = arith.constant 1.000000e+00 : f32
    %129 = vector.broadcast %cst_47 : f32 to vector<8x32xf32>
    %130 = arith.addf %129, %128 : vector<8x32xf32>
    %131 = arith.divf %129, %130 : vector<8x32xf32>
    %132 = vector.extract_strided_slice %121 {offsets = [0, 32], sizes = [8, 32], strides = [1, 1]} : vector<8x96xf32> to vector<8x32xf32>
    %133 = vector.extract_strided_slice %123 {offsets = [0, 32], sizes = [8, 32], strides = [1, 1]} : vector<8x96xf32> to vector<8x32xf32>
    %134 = arith.addf %132, %133 : vector<8x32xf32>
    %135 = arith.negf %134 : vector<8x32xf32>
    %136 = math.exp %135 : vector<8x32xf32>
    %cst_48 = arith.constant 1.000000e+00 : f32
    %137 = vector.broadcast %cst_48 : f32 to vector<8x32xf32>
    %138 = arith.addf %137, %136 : vector<8x32xf32>
    %139 = arith.divf %137, %138 : vector<8x32xf32>
    %140 = vector.extract_strided_slice %121 {offsets = [0, 64], sizes = [8, 32], strides = [1, 1]} : vector<8x96xf32> to vector<8x32xf32>
    %141 = vector.extract_strided_slice %123 {offsets = [0, 64], sizes = [8, 32], strides = [1, 1]} : vector<8x96xf32> to vector<8x32xf32>
    %142 = arith.mulf %131, %141 : vector<8x32xf32>
    %143 = arith.addf %140, %142 : vector<8x32xf32>
    %144 = math.tanh %143 : vector<8x32xf32>
    %cst_49 = arith.constant 1.000000e+00 : f32
    %145 = vector.broadcast %cst_49 : f32 to vector<8x32xf32>
    %146 = arith.subf %145, %139 : vector<8x32xf32>
    %147 = arith.mulf %146, %144 : vector<8x32xf32>
    %148 = arith.mulf %139, %118 : vector<8x32xf32>
    %149 = arith.addf %147, %148 : vector<8x32xf32>
    %c4_i32 = arith.constant 4 : i32
    %150 = arith.index_cast %c4_i32 : i32 to index
    %c0_50 = arith.constant 0 : index
    %c0_51 = arith.constant 0 : index
    %151 = vector.load %arg18[%150, %c0_50, %c0_51] : memref<8x8x96xf32, #tpu.memory_space<vmem>>, vector<1x8x96xf32>
    %152 = vector.shape_cast %151 : vector<1x8x96xf32> to vector<8x96xf32>
    %cst_52 = arith.constant dense<0.000000e+00> : vector<8x96xf32>
    %153 = tpu.matmul %149, %21, %cst_52 {dimension_numbers = #tpu.dot_dimension_numbers<[1], [0], [0], [1], [0, 0, 1, 1], [], []>} : vector<8x32xf32>, vector<32x96xf32>, vector<8x96xf32> -> vector<8x96xf32>
    %154 = arith.addf %153, %24 : vector<8x96xf32>
    %155 = vector.extract_strided_slice %152 {offsets = [0, 0], sizes = [8, 32], strides = [1, 1]} : vector<8x96xf32> to vector<8x32xf32>
    %156 = vector.extract_strided_slice %154 {offsets = [0, 0], sizes = [8, 32], strides = [1, 1]} : vector<8x96xf32> to vector<8x32xf32>
    %157 = arith.addf %155, %156 : vector<8x32xf32>
    %158 = arith.negf %157 : vector<8x32xf32>
    %159 = math.exp %158 : vector<8x32xf32>
    %cst_53 = arith.constant 1.000000e+00 : f32
    %160 = vector.broadcast %cst_53 : f32 to vector<8x32xf32>
    %161 = arith.addf %160, %159 : vector<8x32xf32>
    %162 = arith.divf %160, %161 : vector<8x32xf32>
    %163 = vector.extract_strided_slice %152 {offsets = [0, 32], sizes = [8, 32], strides = [1, 1]} : vector<8x96xf32> to vector<8x32xf32>
    %164 = vector.extract_strided_slice %154 {offsets = [0, 32], sizes = [8, 32], strides = [1, 1]} : vector<8x96xf32> to vector<8x32xf32>
    %165 = arith.addf %163, %164 : vector<8x32xf32>
    %166 = arith.negf %165 : vector<8x32xf32>
    %167 = math.exp %166 : vector<8x32xf32>
    %cst_54 = arith.constant 1.000000e+00 : f32
    %168 = vector.broadcast %cst_54 : f32 to vector<8x32xf32>
    %169 = arith.addf %168, %167 : vector<8x32xf32>
    %170 = arith.divf %168, %169 : vector<8x32xf32>
    %171 = vector.extract_strided_slice %152 {offsets = [0, 64], sizes = [8, 32], strides = [1, 1]} : vector<8x96xf32> to vector<8x32xf32>
    %172 = vector.extract_strided_slice %154 {offsets = [0, 64], sizes = [8, 32], strides = [1, 1]} : vector<8x96xf32> to vector<8x32xf32>
    %173 = arith.mulf %162, %172 : vector<8x32xf32>
    %174 = arith.addf %171, %173 : vector<8x32xf32>
    %175 = math.tanh %174 : vector<8x32xf32>
    %cst_55 = arith.constant 1.000000e+00 : f32
    %176 = vector.broadcast %cst_55 : f32 to vector<8x32xf32>
    %177 = arith.subf %176, %170 : vector<8x32xf32>
    %178 = arith.mulf %177, %175 : vector<8x32xf32>
    %179 = arith.mulf %170, %149 : vector<8x32xf32>
    %180 = arith.addf %178, %179 : vector<8x32xf32>
    %c5_i32 = arith.constant 5 : i32
    %181 = arith.index_cast %c5_i32 : i32 to index
    %c0_56 = arith.constant 0 : index
    %c0_57 = arith.constant 0 : index
    %182 = vector.load %arg18[%181, %c0_56, %c0_57] : memref<8x8x96xf32, #tpu.memory_space<vmem>>, vector<1x8x96xf32>
    %183 = vector.shape_cast %182 : vector<1x8x96xf32> to vector<8x96xf32>
    %cst_58 = arith.constant dense<0.000000e+00> : vector<8x96xf32>
    %184 = tpu.matmul %180, %21, %cst_58 {dimension_numbers = #tpu.dot_dimension_numbers<[1], [0], [0], [1], [0, 0, 1, 1], [], []>} : vector<8x32xf32>, vector<32x96xf32>, vector<8x96xf32> -> vector<8x96xf32>
    %185 = arith.addf %184, %24 : vector<8x96xf32>
    %186 = vector.extract_strided_slice %183 {offsets = [0, 0], sizes = [8, 32], strides = [1, 1]} : vector<8x96xf32> to vector<8x32xf32>
    %187 = vector.extract_strided_slice %185 {offsets = [0, 0], sizes = [8, 32], strides = [1, 1]} : vector<8x96xf32> to vector<8x32xf32>
    %188 = arith.addf %186, %187 : vector<8x32xf32>
    %189 = arith.negf %188 : vector<8x32xf32>
    %190 = math.exp %189 : vector<8x32xf32>
    %cst_59 = arith.constant 1.000000e+00 : f32
    %191 = vector.broadcast %cst_59 : f32 to vector<8x32xf32>
    %192 = arith.addf %191, %190 : vector<8x32xf32>
    %193 = arith.divf %191, %192 : vector<8x32xf32>
    %194 = vector.extract_strided_slice %183 {offsets = [0, 32], sizes = [8, 32], strides = [1, 1]} : vector<8x96xf32> to vector<8x32xf32>
    %195 = vector.extract_strided_slice %185 {offsets = [0, 32], sizes = [8, 32], strides = [1, 1]} : vector<8x96xf32> to vector<8x32xf32>
    %196 = arith.addf %194, %195 : vector<8x32xf32>
    %197 = arith.negf %196 : vector<8x32xf32>
    %198 = math.exp %197 : vector<8x32xf32>
    %cst_60 = arith.constant 1.000000e+00 : f32
    %199 = vector.broadcast %cst_60 : f32 to vector<8x32xf32>
    %200 = arith.addf %199, %198 : vector<8x32xf32>
    %201 = arith.divf %199, %200 : vector<8x32xf32>
    %202 = vector.extract_strided_slice %183 {offsets = [0, 64], sizes = [8, 32], strides = [1, 1]} : vector<8x96xf32> to vector<8x32xf32>
    %203 = vector.extract_strided_slice %185 {offsets = [0, 64], sizes = [8, 32], strides = [1, 1]} : vector<8x96xf32> to vector<8x32xf32>
    %204 = arith.mulf %193, %203 : vector<8x32xf32>
    %205 = arith.addf %202, %204 : vector<8x32xf32>
    %206 = math.tanh %205 : vector<8x32xf32>
    %cst_61 = arith.constant 1.000000e+00 : f32
    %207 = vector.broadcast %cst_61 : f32 to vector<8x32xf32>
    %208 = arith.subf %207, %201 : vector<8x32xf32>
    %209 = arith.mulf %208, %206 : vector<8x32xf32>
    %210 = arith.mulf %201, %180 : vector<8x32xf32>
    %211 = arith.addf %209, %210 : vector<8x32xf32>
    %c6_i32 = arith.constant 6 : i32
    %212 = arith.index_cast %c6_i32 : i32 to index
    %c0_62 = arith.constant 0 : index
    %c0_63 = arith.constant 0 : index
    %213 = vector.load %arg18[%212, %c0_62, %c0_63] : memref<8x8x96xf32, #tpu.memory_space<vmem>>, vector<1x8x96xf32>
    %214 = vector.shape_cast %213 : vector<1x8x96xf32> to vector<8x96xf32>
    %cst_64 = arith.constant dense<0.000000e+00> : vector<8x96xf32>
    %215 = tpu.matmul %211, %21, %cst_64 {dimension_numbers = #tpu.dot_dimension_numbers<[1], [0], [0], [1], [0, 0, 1, 1], [], []>} : vector<8x32xf32>, vector<32x96xf32>, vector<8x96xf32> -> vector<8x96xf32>
    %216 = arith.addf %215, %24 : vector<8x96xf32>
    %217 = vector.extract_strided_slice %214 {offsets = [0, 0], sizes = [8, 32], strides = [1, 1]} : vector<8x96xf32> to vector<8x32xf32>
    %218 = vector.extract_strided_slice %216 {offsets = [0, 0], sizes = [8, 32], strides = [1, 1]} : vector<8x96xf32> to vector<8x32xf32>
    %219 = arith.addf %217, %218 : vector<8x32xf32>
    %220 = arith.negf %219 : vector<8x32xf32>
    %221 = math.exp %220 : vector<8x32xf32>
    %cst_65 = arith.constant 1.000000e+00 : f32
    %222 = vector.broadcast %cst_65 : f32 to vector<8x32xf32>
    %223 = arith.addf %222, %221 : vector<8x32xf32>
    %224 = arith.divf %222, %223 : vector<8x32xf32>
    %225 = vector.extract_strided_slice %214 {offsets = [0, 32], sizes = [8, 32], strides = [1, 1]} : vector<8x96xf32> to vector<8x32xf32>
    %226 = vector.extract_strided_slice %216 {offsets = [0, 32], sizes = [8, 32], strides = [1, 1]} : vector<8x96xf32> to vector<8x32xf32>
    %227 = arith.addf %225, %226 : vector<8x32xf32>
    %228 = arith.negf %227 : vector<8x32xf32>
    %229 = math.exp %228 : vector<8x32xf32>
    %cst_66 = arith.constant 1.000000e+00 : f32
    %230 = vector.broadcast %cst_66 : f32 to vector<8x32xf32>
    %231 = arith.addf %230, %229 : vector<8x32xf32>
    %232 = arith.divf %230, %231 : vector<8x32xf32>
    %233 = vector.extract_strided_slice %214 {offsets = [0, 64], sizes = [8, 32], strides = [1, 1]} : vector<8x96xf32> to vector<8x32xf32>
    %234 = vector.extract_strided_slice %216 {offsets = [0, 64], sizes = [8, 32], strides = [1, 1]} : vector<8x96xf32> to vector<8x32xf32>
    %235 = arith.mulf %224, %234 : vector<8x32xf32>
    %236 = arith.addf %233, %235 : vector<8x32xf32>
    %237 = math.tanh %236 : vector<8x32xf32>
    %cst_67 = arith.constant 1.000000e+00 : f32
    %238 = vector.broadcast %cst_67 : f32 to vector<8x32xf32>
    %239 = arith.subf %238, %232 : vector<8x32xf32>
    %240 = arith.mulf %239, %237 : vector<8x32xf32>
    %241 = arith.mulf %232, %211 : vector<8x32xf32>
    %242 = arith.addf %240, %241 : vector<8x32xf32>
    %c7_i32 = arith.constant 7 : i32
    %243 = arith.index_cast %c7_i32 : i32 to index
    %c0_68 = arith.constant 0 : index
    %c0_69 = arith.constant 0 : index
    %244 = vector.load %arg18[%243, %c0_68, %c0_69] : memref<8x8x96xf32, #tpu.memory_space<vmem>>, vector<1x8x96xf32>
    %245 = vector.shape_cast %244 : vector<1x8x96xf32> to vector<8x96xf32>
    %cst_70 = arith.constant dense<0.000000e+00> : vector<8x96xf32>
    %246 = tpu.matmul %242, %21, %cst_70 {dimension_numbers = #tpu.dot_dimension_numbers<[1], [0], [0], [1], [0, 0, 1, 1], [], []>} : vector<8x32xf32>, vector<32x96xf32>, vector<8x96xf32> -> vector<8x96xf32>
    %247 = arith.addf %246, %24 : vector<8x96xf32>
    %248 = vector.extract_strided_slice %245 {offsets = [0, 0], sizes = [8, 32], strides = [1, 1]} : vector<8x96xf32> to vector<8x32xf32>
    %249 = vector.extract_strided_slice %247 {offsets = [0, 0], sizes = [8, 32], strides = [1, 1]} : vector<8x96xf32> to vector<8x32xf32>
    %250 = arith.addf %248, %249 : vector<8x32xf32>
    %251 = arith.negf %250 : vector<8x32xf32>
    %252 = math.exp %251 : vector<8x32xf32>
    %cst_71 = arith.constant 1.000000e+00 : f32
    %253 = vector.broadcast %cst_71 : f32 to vector<8x32xf32>
    %254 = arith.addf %253, %252 : vector<8x32xf32>
    %255 = arith.divf %253, %254 : vector<8x32xf32>
    %256 = vector.extract_strided_slice %245 {offsets = [0, 32], sizes = [8, 32], strides = [1, 1]} : vector<8x96xf32> to vector<8x32xf32>
    %257 = vector.extract_strided_slice %247 {offsets = [0, 32], sizes = [8, 32], strides = [1, 1]} : vector<8x96xf32> to vector<8x32xf32>
    %258 = arith.addf %256, %257 : vector<8x32xf32>
    %259 = arith.negf %258 : vector<8x32xf32>
    %260 = math.exp %259 : vector<8x32xf32>
    %cst_72 = arith.constant 1.000000e+00 : f32
    %261 = vector.broadcast %cst_72 : f32 to vector<8x32xf32>
    %262 = arith.addf %261, %260 : vector<8x32xf32>
    %263 = arith.divf %261, %262 : vector<8x32xf32>
    %264 = vector.extract_strided_slice %245 {offsets = [0, 64], sizes = [8, 32], strides = [1, 1]} : vector<8x96xf32> to vector<8x32xf32>
    %265 = vector.extract_strided_slice %247 {offsets = [0, 64], sizes = [8, 32], strides = [1, 1]} : vector<8x96xf32> to vector<8x32xf32>
    %266 = arith.mulf %255, %265 : vector<8x32xf32>
    %267 = arith.addf %264, %266 : vector<8x32xf32>
    %268 = math.tanh %267 : vector<8x32xf32>
    %cst_73 = arith.constant 1.000000e+00 : f32
    %269 = vector.broadcast %cst_73 : f32 to vector<8x32xf32>
    %270 = arith.subf %269, %263 : vector<8x32xf32>
    %271 = arith.mulf %270, %268 : vector<8x32xf32>
    %272 = arith.mulf %263, %242 : vector<8x32xf32>
    %273 = arith.addf %271, %272 : vector<8x32xf32>
    %c8_i32 = arith.constant 8 : i32
    %c0_74 = arith.constant 0 : index
    %c0_75 = arith.constant 0 : index
    %274 = vector.load %arg10[%c0_74, %c0_75] : memref<32x96xf32, #tpu.memory_space<vmem>>, vector<32x96xf32>
    %c0_76 = arith.constant 0 : index
    %c0_77 = arith.constant 0 : index
    %275 = vector.load %arg12[%c0_76, %c0_77] : memref<1x96xf32, #tpu.memory_space<vmem>>, vector<1x96xf32>
    %276 = vector.shape_cast %275 : vector<1x96xf32> to vector<1x96xf32>
    %277 = vector.broadcast %276 : vector<1x96xf32> to vector<8x96xf32>
    %c0_78 = arith.constant 0 : index
    %c0_79 = arith.constant 0 : index
    %278 = vector.load %arg11[%c0_78, %c0_79] : memref<1x96xf32, #tpu.memory_space<vmem>>, vector<1x96xf32>
    %279 = vector.shape_cast %278 : vector<1x96xf32> to vector<1x96xf32>
    %280 = vector.broadcast %279 : vector<1x96xf32> to vector<8x96xf32>
    %c0_i32_80 = arith.constant 0 : i32
    %cst_81 = arith.constant dense<0.000000e+00> : vector<8x96xf32>
    %281 = tpu.matmul %273, %274, %cst_81 {dimension_numbers = #tpu.dot_dimension_numbers<[1], [0], [0], [1], [0, 0, 1, 1], [], []>} : vector<8x32xf32>, vector<32x96xf32>, vector<8x96xf32> -> vector<8x96xf32>
    %282 = arith.addf %281, %277 : vector<8x96xf32>
    %283 = vector.extract_strided_slice %280 {offsets = [0, 0], sizes = [8, 32], strides = [1, 1]} : vector<8x96xf32> to vector<8x32xf32>
    %284 = vector.extract_strided_slice %282 {offsets = [0, 0], sizes = [8, 32], strides = [1, 1]} : vector<8x96xf32> to vector<8x32xf32>
    %285 = arith.addf %283, %284 : vector<8x32xf32>
    %286 = arith.negf %285 : vector<8x32xf32>
    %287 = math.exp %286 : vector<8x32xf32>
    %cst_82 = arith.constant 1.000000e+00 : f32
    %288 = vector.broadcast %cst_82 : f32 to vector<8x32xf32>
    %289 = arith.addf %288, %287 : vector<8x32xf32>
    %290 = arith.divf %288, %289 : vector<8x32xf32>
    %291 = vector.extract_strided_slice %280 {offsets = [0, 32], sizes = [8, 32], strides = [1, 1]} : vector<8x96xf32> to vector<8x32xf32>
    %292 = vector.extract_strided_slice %282 {offsets = [0, 32], sizes = [8, 32], strides = [1, 1]} : vector<8x96xf32> to vector<8x32xf32>
    %293 = arith.addf %291, %292 : vector<8x32xf32>
    %294 = arith.negf %293 : vector<8x32xf32>
    %295 = math.exp %294 : vector<8x32xf32>
    %cst_83 = arith.constant 1.000000e+00 : f32
    %296 = vector.broadcast %cst_83 : f32 to vector<8x32xf32>
    %297 = arith.addf %296, %295 : vector<8x32xf32>
    %298 = arith.divf %296, %297 : vector<8x32xf32>
    %299 = vector.extract_strided_slice %280 {offsets = [0, 64], sizes = [8, 32], strides = [1, 1]} : vector<8x96xf32> to vector<8x32xf32>
    %300 = vector.extract_strided_slice %282 {offsets = [0, 64], sizes = [8, 32], strides = [1, 1]} : vector<8x96xf32> to vector<8x32xf32>
    %301 = arith.mulf %290, %300 : vector<8x32xf32>
    %302 = arith.addf %299, %301 : vector<8x32xf32>
    %303 = math.tanh %302 : vector<8x32xf32>
    %cst_84 = arith.constant 1.000000e+00 : f32
    %304 = vector.broadcast %cst_84 : f32 to vector<8x32xf32>
    %305 = arith.subf %304, %298 : vector<8x32xf32>
    %306 = arith.mulf %305, %303 : vector<8x32xf32>
    %307 = arith.mulf %298, %273 : vector<8x32xf32>
    %308 = arith.addf %306, %307 : vector<8x32xf32>
    %309 = arith.index_cast %c0_i32_80 : i32 to index
    %c0_85 = arith.constant 0 : index
    %c0_86 = arith.constant 0 : index
    %310 = vector.load %arg19[%309, %c0_85, %c0_86] : memref<3x8x32xf32, #tpu.memory_space<vmem>>, vector<1x8x32xf32>
    %311 = vector.shape_cast %310 : vector<1x8x32xf32> to vector<8x32xf32>
    %312 = vector.shape_cast %308 : vector<8x32xf32> to vector<1x8x32xf32>
    tpu.vector_store %arg19[%309, %c0_85, %c0_86], %312 {strides = array<i32>} : memref<3x8x32xf32, #tpu.memory_space<vmem>>, vector<1x8x32xf32>,
    %c1_i32_87 = arith.constant 1 : i32
    %cst_88 = arith.constant dense<0.000000e+00> : vector<8x96xf32>
    %313 = tpu.matmul %308, %274, %cst_88 {dimension_numbers = #tpu.dot_dimension_numbers<[1], [0], [0], [1], [0, 0, 1, 1], [], []>} : vector<8x32xf32>, vector<32x96xf32>, vector<8x96xf32> -> vector<8x96xf32>
    %314 = arith.addf %313, %277 : vector<8x96xf32>
    %315 = vector.extract_strided_slice %280 {offsets = [0, 0], sizes = [8, 32], strides = [1, 1]} : vector<8x96xf32> to vector<8x32xf32>
    %316 = vector.extract_strided_slice %314 {offsets = [0, 0], sizes = [8, 32], strides = [1, 1]} : vector<8x96xf32> to vector<8x32xf32>
    %317 = arith.addf %315, %316 : vector<8x32xf32>
    %318 = arith.negf %317 : vector<8x32xf32>
    %319 = math.exp %318 : vector<8x32xf32>
    %cst_89 = arith.constant 1.000000e+00 : f32
    %320 = vector.broadcast %cst_89 : f32 to vector<8x32xf32>
    %321 = arith.addf %320, %319 : vector<8x32xf32>
    %322 = arith.divf %320, %321 : vector<8x32xf32>
    %323 = vector.extract_strided_slice %280 {offsets = [0, 32], sizes = [8, 32], strides = [1, 1]} : vector<8x96xf32> to vector<8x32xf32>
    %324 = vector.extract_strided_slice %314 {offsets = [0, 32], sizes = [8, 32], strides = [1, 1]} : vector<8x96xf32> to vector<8x32xf32>
    %325 = arith.addf %323, %324 : vector<8x32xf32>
    %326 = arith.negf %325 : vector<8x32xf32>
    %327 = math.exp %326 : vector<8x32xf32>
    %cst_90 = arith.constant 1.000000e+00 : f32
    %328 = vector.broadcast %cst_90 : f32 to vector<8x32xf32>
    %329 = arith.addf %328, %327 : vector<8x32xf32>
    %330 = arith.divf %328, %329 : vector<8x32xf32>
    %331 = vector.extract_strided_slice %280 {offsets = [0, 64], sizes = [8, 32], strides = [1, 1]} : vector<8x96xf32> to vector<8x32xf32>
    %332 = vector.extract_strided_slice %314 {offsets = [0, 64], sizes = [8, 32], strides = [1, 1]} : vector<8x96xf32> to vector<8x32xf32>
    %333 = arith.mulf %322, %332 : vector<8x32xf32>
    %334 = arith.addf %331, %333 : vector<8x32xf32>
    %335 = math.tanh %334 : vector<8x32xf32>
    %cst_91 = arith.constant 1.000000e+00 : f32
    %336 = vector.broadcast %cst_91 : f32 to vector<8x32xf32>
    %337 = arith.subf %336, %330 : vector<8x32xf32>
    %338 = arith.mulf %337, %335 : vector<8x32xf32>
    %339 = arith.mulf %330, %308 : vector<8x32xf32>
    %340 = arith.addf %338, %339 : vector<8x32xf32>
    %341 = arith.index_cast %c1_i32_87 : i32 to index
    %c0_92 = arith.constant 0 : index
    %c0_93 = arith.constant 0 : index
    %342 = vector.load %arg19[%341, %c0_92, %c0_93] : memref<3x8x32xf32, #tpu.memory_space<vmem>>, vector<1x8x32xf32>
    %343 = vector.shape_cast %342 : vector<1x8x32xf32> to vector<8x32xf32>
    %344 = vector.shape_cast %340 : vector<8x32xf32> to vector<1x8x32xf32>
    tpu.vector_store %arg19[%341, %c0_92, %c0_93], %344 {strides = array<i32>} : memref<3x8x32xf32, #tpu.memory_space<vmem>>, vector<1x8x32xf32>,
    %c2_i32_94 = arith.constant 2 : i32
    %cst_95 = arith.constant dense<0.000000e+00> : vector<8x96xf32>
    %345 = tpu.matmul %340, %274, %cst_95 {dimension_numbers = #tpu.dot_dimension_numbers<[1], [0], [0], [1], [0, 0, 1, 1], [], []>} : vector<8x32xf32>, vector<32x96xf32>, vector<8x96xf32> -> vector<8x96xf32>
    %346 = arith.addf %345, %277 : vector<8x96xf32>
    %347 = vector.extract_strided_slice %280 {offsets = [0, 0], sizes = [8, 32], strides = [1, 1]} : vector<8x96xf32> to vector<8x32xf32>
    %348 = vector.extract_strided_slice %346 {offsets = [0, 0], sizes = [8, 32], strides = [1, 1]} : vector<8x96xf32> to vector<8x32xf32>
    %349 = arith.addf %347, %348 : vector<8x32xf32>
    %350 = arith.negf %349 : vector<8x32xf32>
    %351 = math.exp %350 : vector<8x32xf32>
    %cst_96 = arith.constant 1.000000e+00 : f32
    %352 = vector.broadcast %cst_96 : f32 to vector<8x32xf32>
    %353 = arith.addf %352, %351 : vector<8x32xf32>
    %354 = arith.divf %352, %353 : vector<8x32xf32>
    %355 = vector.extract_strided_slice %280 {offsets = [0, 32], sizes = [8, 32], strides = [1, 1]} : vector<8x96xf32> to vector<8x32xf32>
    %356 = vector.extract_strided_slice %346 {offsets = [0, 32], sizes = [8, 32], strides = [1, 1]} : vector<8x96xf32> to vector<8x32xf32>
    %357 = arith.addf %355, %356 : vector<8x32xf32>
    %358 = arith.negf %357 : vector<8x32xf32>
    %359 = math.exp %358 : vector<8x32xf32>
    %cst_97 = arith.constant 1.000000e+00 : f32
    %360 = vector.broadcast %cst_97 : f32 to vector<8x32xf32>
    %361 = arith.addf %360, %359 : vector<8x32xf32>
    %362 = arith.divf %360, %361 : vector<8x32xf32>
    %363 = vector.extract_strided_slice %280 {offsets = [0, 64], sizes = [8, 32], strides = [1, 1]} : vector<8x96xf32> to vector<8x32xf32>
    %364 = vector.extract_strided_slice %346 {offsets = [0, 64], sizes = [8, 32], strides = [1, 1]} : vector<8x96xf32> to vector<8x32xf32>
    %365 = arith.mulf %354, %364 : vector<8x32xf32>
    %366 = arith.addf %363, %365 : vector<8x32xf32>
    %367 = math.tanh %366 : vector<8x32xf32>
    %cst_98 = arith.constant 1.000000e+00 : f32
    %368 = vector.broadcast %cst_98 : f32 to vector<8x32xf32>
    %369 = arith.subf %368, %362 : vector<8x32xf32>
    %370 = arith.mulf %369, %367 : vector<8x32xf32>
    %371 = arith.mulf %362, %340 : vector<8x32xf32>
    %372 = arith.addf %370, %371 : vector<8x32xf32>
    %373 = arith.index_cast %c2_i32_94 : i32 to index
    %c0_99 = arith.constant 0 : index
    %c0_100 = arith.constant 0 : index
    %374 = vector.load %arg19[%373, %c0_99, %c0_100] : memref<3x8x32xf32, #tpu.memory_space<vmem>>, vector<1x8x32xf32>
    %375 = vector.shape_cast %374 : vector<1x8x32xf32> to vector<8x32xf32>
    %376 = vector.shape_cast %372 : vector<8x32xf32> to vector<1x8x32xf32>
    tpu.vector_store %arg19[%373, %c0_99, %c0_100], %376 {strides = array<i32>} : memref<3x8x32xf32, #tpu.memory_space<vmem>>, vector<1x8x32xf32>,
    %c3_i32_101 = arith.constant 3 : i32
    %c0_102 = arith.constant 0 : index
    %c0_103 = arith.constant 0 : index
    %c0_104 = arith.constant 0 : index
    %377 = vector.load %arg19[%c0_102, %c0_103, %c0_104] : memref<3x8x32xf32, #tpu.memory_space<vmem>>, vector<3x8x32xf32>
    %378 = vector.shape_cast %377 : vector<3x8x32xf32> to vector<24x32xf32>
    %c0_105 = arith.constant 0 : index
    %c0_106 = arith.constant 0 : index
    %379 = vector.load %arg13[%c0_105, %c0_106] : memref<32x32xf32, #tpu.memory_space<vmem>>, vector<32x32xf32>
    %cst_107 = arith.constant dense<0.000000e+00> : vector<24x32xf32>
    %380 = tpu.matmul %378, %379, %cst_107 {dimension_numbers = #tpu.dot_dimension_numbers<[1], [0], [0], [1], [0, 0, 1, 1], [], []>} : vector<24x32xf32>, vector<32x32xf32>, vector<24x32xf32> -> vector<24x32xf32>
    %c0_108 = arith.constant 0 : index
    %c0_109 = arith.constant 0 : index
    %381 = vector.load %arg14[%c0_108, %c0_109] : memref<1x32xf32, #tpu.memory_space<vmem>>, vector<1x32xf32>
    %382 = vector.broadcast %381 : vector<1x32xf32> to vector<24x32xf32>
    %383 = arith.addf %380, %382 : vector<24x32xf32>
    %cst_110 = arith.constant 0.000000e+00 : f32
    %384 = vector.broadcast %cst_110 : f32 to vector<24x32xf32>
    %385 = arith.maximumf %383, %384 : vector<24x32xf32>
    %c0_111 = arith.constant 0 : index
    %c0_112 = arith.constant 0 : index
    %386 = vector.load %arg15[%c0_111, %c0_112] : memref<32x2xf32, #tpu.memory_space<vmem>>, vector<32x2xf32>
    %cst_113 = arith.constant dense<0.000000e+00> : vector<24x2xf32>
    %387 = tpu.matmul %385, %386, %cst_113 {dimension_numbers = #tpu.dot_dimension_numbers<[1], [0], [0], [1], [0, 0, 1, 1], [], []>} : vector<24x32xf32>, vector<32x2xf32>, vector<24x2xf32> -> vector<24x2xf32>
    %c0_114 = arith.constant 0 : index
    %c0_115 = arith.constant 0 : index
    %388 = vector.load %arg16[%c0_114, %c0_115] : memref<1x2xf32, #tpu.memory_space<vmem>>, vector<1x2xf32>
    %389 = vector.broadcast %388 : vector<1x2xf32> to vector<24x2xf32>
    %390 = arith.addf %387, %389 : vector<24x2xf32>
    %391 = vector.shape_cast %390 : vector<24x2xf32> to vector<3x8x2xf32>
    %c0_116 = arith.constant 0 : index
    %c0_117 = arith.constant 0 : index
    %c0_118 = arith.constant 0 : index
    %392 = vector.load %arg17[%c0_116, %c0_117, %c0_118] : memref<3x8x2xf32, #tpu.memory_space<vmem>>, vector<3x8x2xf32>
    tpu.vector_store %arg17[%c0_116, %c0_117, %c0_118], %391 {strides = array<i32>} : memref<3x8x2xf32, #tpu.memory_space<vmem>>, vector<3x8x2xf32>,
    return
  }
  func.func @transform_0(%arg0: i32) -> (i32, i32, i32) {
    %c0_i32 = arith.constant 0 : i32
    %c0_i32_0 = arith.constant 0 : i32
    %c0_i32_1 = arith.constant 0 : i32
    return %c0_i32, %arg0, %c0_i32_0 : i32, i32, i32
  }
  func.func @transform_1(%arg0: i32) -> (i32, i32, i32) {
    %c0_i32 = arith.constant 0 : i32
    %c0_i32_0 = arith.constant 0 : i32
    %c0_i32_1 = arith.constant 0 : i32
    return %c0_i32, %arg0, %c0_i32_0 : i32, i32, i32
  }
  func.func @transform_2(%arg0: i32) -> (i32, i32) {
    %c0_i32 = arith.constant 0 : i32
    %c0_i32_0 = arith.constant 0 : i32
    %c0_i32_1 = arith.constant 0 : i32
    return %c0_i32, %c0_i32_0 : i32, i32
  }
  func.func @transform_3(%arg0: i32) -> (i32, i32) {
    %c0_i32 = arith.constant 0 : i32
    %c0_i32_0 = arith.constant 0 : i32
    %c0_i32_1 = arith.constant 0 : i32
    return %c0_i32, %c0_i32_0 : i32, i32
  }
  func.func @transform_4(%arg0: i32) -> (i32, i32) {
    %c0_i32 = arith.constant 0 : i32
    %c0_i32_0 = arith.constant 0 : i32
    %c0_i32_1 = arith.constant 0 : i32
    return %c0_i32, %c0_i32_0 : i32, i32
  }
  func.func @transform_5(%arg0: i32) -> (i32, i32) {
    %c0_i32 = arith.constant 0 : i32
    %c0_i32_0 = arith.constant 0 : i32
    %c0_i32_1 = arith.constant 0 : i32
    return %c0_i32, %c0_i32_0 : i32, i32
  }
  func.func @transform_6(%arg0: i32) -> (i32, i32) {
    %c0_i32 = arith.constant 0 : i32
    %c0_i32_0 = arith.constant 0 : i32
    %c0_i32_1 = arith.constant 0 : i32
    return %c0_i32, %c0_i32_0 : i32, i32
  }
  func.func @transform_7(%arg0: i32) -> (i32, i32) {
    %c0_i32 = arith.constant 0 : i32
    %c0_i32_0 = arith.constant 0 : i32
    %c0_i32_1 = arith.constant 0 : i32
    return %c0_i32, %c0_i32_0 : i32, i32
  }
  func.func @transform_8(%arg0: i32) -> (i32, i32) {
    %c0_i32 = arith.constant 0 : i32
    %c0_i32_0 = arith.constant 0 : i32
    %c0_i32_1 = arith.constant 0 : i32
    return %c0_i32, %c0_i32_0 : i32, i32
  }
  func.func @transform_9(%arg0: i32) -> (i32, i32) {
    %c0_i32 = arith.constant 0 : i32
    %c0_i32_0 = arith.constant 0 : i32
    %c0_i32_1 = arith.constant 0 : i32
    return %c0_i32, %c0_i32_0 : i32, i32
  }
  func.func @transform_10(%arg0: i32) -> (i32, i32) {
    %c0_i32 = arith.constant 0 : i32
    %c0_i32_0 = arith.constant 0 : i32
    %c0_i32_1 = arith.constant 0 : i32
    return %c0_i32, %c0_i32_0 : i32, i32
  }
  func.func @transform_11(%arg0: i32) -> (i32, i32) {
    %c0_i32 = arith.constant 0 : i32
    %c0_i32_0 = arith.constant 0 : i32
    %c0_i32_1 = arith.constant 0 : i32
    return %c0_i32, %c0_i32_0 : i32, i32
  }
  func.func @transform_12(%arg0: i32) -> (i32, i32) {
    %c0_i32 = arith.constant 0 : i32
    %c0_i32_0 = arith.constant 0 : i32
    %c0_i32_1 = arith.constant 0 : i32
    return %c0_i32, %c0_i32_0 : i32, i32
  }
  func.func @transform_13(%arg0: i32) -> (i32, i32) {
    %c0_i32 = arith.constant 0 : i32
    %c0_i32_0 = arith.constant 0 : i32
    %c0_i32_1 = arith.constant 0 : i32
    return %c0_i32, %c0_i32_0 : i32, i32
  }
  func.func @transform_14(%arg0: i32) -> (i32, i32) {
    %c0_i32 = arith.constant 0 : i32
    %c0_i32_0 = arith.constant 0 : i32
    %c0_i32_1 = arith.constant 0 : i32
    return %c0_i32, %c0_i32_0 : i32, i32
  }
  func.func @transform_15(%arg0: i32) -> (i32, i32) {
    %c0_i32 = arith.constant 0 : i32
    %c0_i32_0 = arith.constant 0 : i32
    %c0_i32_1 = arith.constant 0 : i32
    return %c0_i32, %c0_i32_0 : i32, i32
  }
  func.func @transform_16(%arg0: i32) -> (i32, i32, i32) {
    %c0_i32 = arith.constant 0 : i32
    %c0_i32_0 = arith.constant 0 : i32
    %c0_i32_1 = arith.constant 0 : i32
    return %c0_i32, %arg0, %c0_i32_0 : i32, i32, i32
  }
}

</mosaic_0001>

<llo_original>
// kernel: tpu_custom_call.1
$region0: #{tpu_custom_call.1}
  #allocation0 [shape = 'u32[]', space=smem, size = 0x4, offset = 0x4, fixed_abs, tag = 'smem constant byte address 0x4 - core index']
  #allocation1 [shape = 'u32[144,128]{1,0:T(1,128)}', space=vmem, size = 0x12000, scoped, tag = 'internal scratch']
  #allocation2 [shape = 'f32[8,8,96]{2,1,0:T(8,128)}', space=vmem, size = 0x8000, scoped, tag = 'scratch operand']
  #allocation3 [shape = 'f32[3,8,32]{2,1,0:T(8,128)}', space=vmem, size = 0x3000, scoped, tag = 'scratch operand']
  %s0 = inlined_call_operand.vmem [shape: f32[8,8,5], index: 0, kind: input, shape index: {}]
  %s1 = inlined_call_operand.vmem [shape: f32[8,8,3], index: 1, kind: input, shape index: {}]
  %s2 = inlined_call_operand.vmem [shape: f32[5,32], index: 2, kind: input, shape index: {}]
  %s3 = inlined_call_operand.vmem [shape: f32[3,32], index: 3, kind: input, shape index: {}]
  %s4 = inlined_call_operand.vmem [shape: f32[1,32], index: 4, kind: input, shape index: {}]
  %s5 = inlined_call_operand.vmem [shape: f32[32,96], index: 5, kind: input, shape index: {}]
  %s6 = inlined_call_operand.vmem [shape: f32[1,96], index: 6, kind: input, shape index: {}]
  %s7 = inlined_call_operand.vmem [shape: f32[32,96], index: 7, kind: input, shape index: {}]
  %s8 = inlined_call_operand.vmem [shape: f32[1,96], index: 8, kind: input, shape index: {}]
  %s9 = inlined_call_operand.vmem [shape: f32[32,96], index: 9, kind: input, shape index: {}]
  %s10 = inlined_call_operand.vmem [shape: f32[1,96], index: 10, kind: input, shape index: {}]
  %s11 = inlined_call_operand.vmem [shape: f32[1,96], index: 11, kind: input, shape index: {}]
  %s12 = inlined_call_operand.vmem [shape: f32[32,32], index: 12, kind: input, shape index: {}]
  %s13 = inlined_call_operand.vmem [shape: f32[1,32], index: 13, kind: input, shape index: {}]
  %s14 = inlined_call_operand.vmem [shape: f32[32,2], index: 14, kind: input, shape index: {}]
  %s15 = inlined_call_operand.vmem [shape: f32[1,2], index: 15, kind: input, shape index: {}]
  %s16 = inlined_call_operand.vmem [shape: f32[3,8,2], index: 16, kind: output, shape index: {}]
  %s17 = sld [smem:[#allocation0]]
  $region74: #{tpu_custom_call.1} parent=0
    _
  %s19 = ssub.s32 1, %s17
  %s20 = scalar_select 0, %s19, %s17
  // Predicated region
  $region2: #{tpu_custom_call.1} parent=0 // pred_check
    _
  $region3: #{tpu_custom_call.1} parent=0 // pred_check_branch
    %22 = sbr.rel (0) target = $region5
  $region4: #{tpu_custom_call.1} parent=0 // pred_region
    _
  $region5: #{tpu_custom_call.1} parent=0 // pred_fallthru
    _
  // Predicated region
  $region6: #{tpu_custom_call.1} parent=0 // pred_check
    _
  $region7: #{tpu_custom_call.1} parent=0 // pred_check_branch
    %24 = sbr.rel (0) target = $region9
  $region8: #{tpu_custom_call.1} parent=0 // pred_region
    _
  $region9: #{tpu_custom_call.1} parent=0 // pred_fallthru
    _
  // Predicated region
  $region10: #{tpu_custom_call.1} parent=0 // pred_check
    _
  $region11: #{tpu_custom_call.1} parent=0 // pred_check_branch
    %26 = sbr.rel (0) target = $region13
  $region12: #{tpu_custom_call.1} parent=0 // pred_region
    _
  $region13: #{tpu_custom_call.1} parent=0 // pred_fallthru
    _
  // Predicated region
  $region14: #{tpu_custom_call.1} parent=0 // pred_check
    _
  $region15: #{tpu_custom_call.1} parent=0 // pred_check_branch
    %28 = sbr.rel (0) target = $region17
  $region16: #{tpu_custom_call.1} parent=0 // pred_region
    _
  $region17: #{tpu_custom_call.1} parent=0 // pred_fallthru
    _
  // Predicated region
  $region18: #{tpu_custom_call.1} parent=0 // pred_check
    _
  $region19: #{tpu_custom_call.1} parent=0 // pred_check_branch
    %30 = sbr.rel (0) target = $region21
  $region20: #{tpu_custom_call.1} parent=0 // pred_region
    _
  $region21: #{tpu_custom_call.1} parent=0 // pred_fallthru
    _
  // Predicated region
  $region22: #{tpu_custom_call.1} parent=0 // pred_check
    _
  $region23: #{tpu_custom_call.1} parent=0 // pred_check_branch
    %32 = sbr.rel (0) target = $region25
  $region24: #{tpu_custom_call.1} parent=0 // pred_region
    _
  $region25: #{tpu_custom_call.1} parent=0 // pred_fallthru
    _
  // Predicated region
  $region26: #{tpu_custom_call.1} parent=0 // pred_check
    _
  $region27: #{tpu_custom_call.1} parent=0 // pred_check_branch
    %34 = sbr.rel (0) target = $region29
  $region28: #{tpu_custom_call.1} parent=0 // pred_region
    _
  $region29: #{tpu_custom_call.1} parent=0 // pred_fallthru
    _
  // Predicated region
  $region30: #{tpu_custom_call.1} parent=0 // pred_check
    _
  $region31: #{tpu_custom_call.1} parent=0 // pred_check_branch
    %36 = sbr.rel (0) target = $region33
  $region32: #{tpu_custom_call.1} parent=0 // pred_region
    _
  $region33: #{tpu_custom_call.1} parent=0 // pred_fallthru
    _
  // Predicated region
  $region34: #{tpu_custom_call.1} parent=0 // pred_check
    _
  $region35: #{tpu_custom_call.1} parent=0 // pred_check_branch
    %38 = sbr.rel (0) target = $region37
  $region36: #{tpu_custom_call.1} parent=0 // pred_region
    _
  $region37: #{tpu_custom_call.1} parent=0 // pred_fallthru
    _
  // Predicated region
  $region38: #{tpu_custom_call.1} parent=0 // pred_check
    _
  $region39: #{tpu_custom_call.1} parent=0 // pred_check_branch
    %40 = sbr.rel (0) target = $region41
  $region40: #{tpu_custom_call.1} parent=0 // pred_region
    _
  $region41: #{tpu_custom_call.1} parent=0 // pred_fallthru
    _
  // Predicated region
  $region42: #{tpu_custom_call.1} parent=0 // pred_check
    _
  $region43: #{tpu_custom_call.1} parent=0 // pred_check_branch
    %42 = sbr.rel (0) target = $region45
  $region44: #{tpu_custom_call.1} parent=0 // pred_region
    _
  $region45: #{tpu_custom_call.1} parent=0 // pred_fallthru
    _
  // Predicated region
  $region46: #{tpu_custom_call.1} parent=0 // pred_check
    _
  $region47: #{tpu_custom_call.1} parent=0 // pred_check_branch
    %44 = sbr.rel (0) target = $region49
  $region48: #{tpu_custom_call.1} parent=0 // pred_region
    _
  $region49: #{tpu_custom_call.1} parent=0 // pred_fallthru
    _
  // Predicated region
  $region50: #{tpu_custom_call.1} parent=0 // pred_check
    _
  $region51: #{tpu_custom_call.1} parent=0 // pred_check_branch
    %46 = sbr.rel (0) target = $region53
  $region52: #{tpu_custom_call.1} parent=0 // pred_region
    _
  $region53: #{tpu_custom_call.1} parent=0 // pred_fallthru
    _
  // Predicated region
  $region54: #{tpu_custom_call.1} parent=0 // pred_check
    _
  $region55: #{tpu_custom_call.1} parent=0 // pred_check_branch
    %48 = sbr.rel (0) target = $region57
  $region56: #{tpu_custom_call.1} parent=0 // pred_region
    _
  $region57: #{tpu_custom_call.1} parent=0 // pred_fallthru
    _
  // Predicated region
  $region58: #{tpu_custom_call.1} parent=0 // pred_check
    _
  $region59: #{tpu_custom_call.1} parent=0 // pred_check_branch
    %50 = sbr.rel (0) target = $region61
  $region60: #{tpu_custom_call.1} parent=0 // pred_region
    _
  $region61: #{tpu_custom_call.1} parent=0 // pred_fallthru
    _
  // Predicated region
  $region62: #{tpu_custom_call.1} parent=0 // pred_check
    _
  $region63: #{tpu_custom_call.1} parent=0 // pred_check_branch
    %52 = sbr.rel (0) target = $region65
  $region64: #{tpu_custom_call.1} parent=0 // pred_region
    _
  $region65: #{tpu_custom_call.1} parent=0 // pred_fallthru
    _
  %v53 = vld [vmem:[%s0] sm:$0xff]
  %v54 = vld [vmem:[%s0 + $0x8] sm:$0xff]
  %v55 = vld [vmem:[%s0 + $0x10] sm:$0xff]
  %v56 = vld [vmem:[%s0 + $0x18] sm:$0xff]
  %v57 = vld [vmem:[%s0 + $0x20] sm:$0xff]
  %v58 = vld [vmem:[%s0 + $0x28] sm:$0xff]
  %v59 = vld [vmem:[%s0 + $0x30] sm:$0xff]
  %v60 = vld [vmem:[%s0 + $0x38] sm:$0xff]
  %v61 = vld [vmem:[%s1] sm:$0xff]
  %v62 = vld [vmem:[%s1 + $0x8] sm:$0xff]
  %v63 = vld [vmem:[%s1 + $0x10] sm:$0xff]
  %v64 = vld [vmem:[%s1 + $0x18] sm:$0xff]
  %v65 = vld [vmem:[%s1 + $0x20] sm:$0xff]
  %v66 = vld [vmem:[%s1 + $0x28] sm:$0xff]
  %v67 = vld [vmem:[%s1 + $0x30] sm:$0xff]
  %v68 = vld [vmem:[%s1 + $0x38] sm:$0xff]
  %v69 = vld [vmem:[%s2] sm:$0x1f]
  %v70 = vld [vmem:[%s3] sm:$0x7]
  %vm71 = vcmask 23552
  %v73 = vsel %vm71, %v61, 0
  %v76 = vsel %vm71, %v62, 0
  %v79 = vsel %vm71, %v63, 0
  %v82 = vsel %vm71, %v64, 0
  %v85 = vsel %vm71, %v65, 0
  %v88 = vsel %vm71, %v66, 0
  %v91 = vsel %vm71, %v67, 0
  %v94 = vsel %vm71, %v68, 0
  %vm96 = vcmask 1042432
  %v98 = vsel %vm96, %v70, 0
  %100 = vmatprep.subr.mxu0 0.0
  %101 = vmatpush1.msra.mxu0 %v98
  %102 = vmatprep.subr.mxu0 0.0
  %103 = vmatpush1.msra.mxu0 0.0
  %104 = vmatprep.subr.mxu0 0.0
  %105 = vmatpush1.msra.mxu0 0.0
  %106 = vmatprep.subr.mxu0 0.0
  %107 = vmatpush1.msra.mxu0 0.0
  %108 = vmatprep.subr.mxu0 0.0
  %109 = vmatpush1.msra.mxu0 0.0
  %110 = vmatprep.subr.mxu0 0.0
  %111 = vmatpush1.msra.mxu0 0.0
  %112 = vmatprep.subr.mxu0 0.0
  %113 = vmatpush1.msra.mxu0 0.0
  %114 = vmatprep.subr.mxu0 0.0
  %115 = vmatpush1.msra.mxu0 0.0
  %116 = vmatprep.subr.mxu0 0.0
  %117 = vmatpush1.msra.mxu0 0.0
  %118 = vmatprep.subr.mxu0 0.0
  %119 = vmatpush1.msra.mxu0 0.0
  %120 = vmatprep.subr.mxu0 0.0
  %121 = vmatpush1.msra.mxu0 0.0
  %122 = vmatprep.subr.mxu0 0.0
  %123 = vmatpush1.msra.mxu0 0.0
  %124 = vmatprep.subr.mxu0 0.0
  %125 = vmatpush1.msra.mxu0 0.0
  %126 = vmatprep.subr.mxu0 0.0
  %127 = vmatpush1.msra.mxu0 0.0
  %128 = vmatprep.subr.mxu0 0.0
  %129 = vmatpush1.msra.mxu0 0.0
  %130 = vmatprep.subr.mxu0 0.0
  %131 = vmatpush1.msra.mxu0 0.0
  %132 = vmatprep.subr.mxu0 0.0
  %133 = vmatpush1.msra.mxu0 0.0
  %134 = vmatprep.subr.mxu0 0.0
  %135 = vmatpush1.msra.mxu0 0.0
  %136 = vmatprep.subr.mxu0 0.0
  %137 = vmatpush1.msra.mxu0 0.0
  %138 = vmatprep.subr.mxu0 0.0
  %139 = vmatpush1.msra.mxu0 0.0
  %140 = vmatprep.subr.mxu0 0.0
  %141 = vmatpush1.msra.mxu0 0.0
  %142 = vmatprep.subr.mxu0 0.0
  %143 = vmatpush1.msra.mxu0 0.0
  %144 = vmatprep.subr.mxu0 0.0
  %145 = vmatpush1.msra.mxu0 0.0
  %146 = vmatprep.subr.mxu0 0.0
  %147 = vmatpush1.msra.mxu0 0.0
  %148 = vmatprep.subr.mxu0 0.0
  %149 = vmatpush1.msra.mxu0 0.0
  %150 = vmatprep.subr.mxu0 0.0
  %151 = vmatpush1.msra.mxu0 0.0
  %152 = vmatprep.subr.mxu0 0.0
  %153 = vmatpush1.msra.mxu0 0.0
  %154 = vmatprep.subr.mxu0 0.0
  %155 = vmatpush1.msra.mxu0 0.0
  %156 = vmatprep.subr.mxu0 0.0
  %157 = vmatpush1.msra.mxu0 0.0
  %158 = vmatprep.subr.mxu0 0.0
  %159 = vmatpush1.msra.mxu0 0.0
  %160 = vmatprep.subr.mxu0 0.0
  %161 = vmatpush1.msra.mxu0 0.0
  %162 = vmatprep.subr.mxu0 0.0
  %163 = vmatpush1.msra.mxu0 0.0
  %164 = vmatprep.mubr.f32.mxu0 0.0
  %165 = vmatmul.mubr.f32.gmra.mrb[0].mxu0 %v73
  %v166 = vpop.f32.mrb[0].mxu0
  %v167 = vadd.f32 0.0, %v166
  %v168 = vpop.f32.mrb[0].mxu0
  %169 = vmatprep.mubr.f32.mxu0 0.0
  %170 = vmatmul.mubr.f32.gmra.mrb[0].mxu0 %v76
  %v171 = vpop.f32.mrb[0].mxu0
  %v172 = vadd.f32 0.0, %v171
  %v173 = vpop.f32.mrb[0].mxu0
  %174 = vmatprep.mubr.f32.mxu0 0.0
  %175 = vmatmul.mubr.f32.gmra.mrb[0].mxu0 %v79
  %v176 = vpop.f32.mrb[0].mxu0
  %v177 = vadd.f32 0.0, %v176
  %v178 = vpop.f32.mrb[0].mxu0
  %179 = vmatprep.mubr.f32.mxu0 0.0
  %180 = vmatmul.mubr.f32.gmra.mrb[0].mxu0 %v82
  %v181 = vpop.f32.mrb[0].mxu0
  %v182 = vadd.f32 0.0, %v181
  %v183 = vpop.f32.mrb[0].mxu0
  %184 = vmatprep.mubr.f32.mxu0 0.0
  %185 = vmatmul.mubr.f32.gmra.mrb[0].mxu0 %v85
  %v186 = vpop.f32.mrb[0].mxu0
  %v187 = vadd.f32 0.0, %v186
  %v188 = vpop.f32.mrb[0].mxu0
  %189 = vmatprep.mubr.f32.mxu0 0.0
  %190 = vmatmul.mubr.f32.gmra.mrb[0].mxu0 %v88
  %v191 = vpop.f32.mrb[0].mxu0
  %v192 = vadd.f32 0.0, %v191
  %v193 = vpop.f32.mrb[0].mxu0
  %194 = vmatprep.mubr.f32.mxu0 0.0
  %195 = vmatmul.mubr.f32.gmra.mrb[0].mxu0 %v91
  %v196 = vpop.f32.mrb[0].mxu0
  %v197 = vadd.f32 0.0, %v196
  %v198 = vpop.f32.mrb[0].mxu0
  %199 = vmatprep.mubr.f32.mxu0 0.0
  %200 = vmatmul.mubr.f32.gmra.mrb[0].mxu0 %v94
  %v201 = vpop.f32.mrb[0].mxu0
  %v202 = vadd.f32 0.0, %v201
  %v203 = vpop.f32.mrb[0].mxu0
  %204 = vdwg.mxu0
  %vm205 = vcmask 39936
  %v207 = vsel %vm205, %v53, 0
  %v210 = vsel %vm205, %v54, 0
  %v213 = vsel %vm205, %v55, 0
  %v216 = vsel %vm205, %v56, 0
  %v219 = vsel %vm205, %v57, 0
  %v222 = vsel %vm205, %v58, 0
  %v225 = vsel %vm205, %v59, 0
  %v228 = vsel %vm205, %v60, 0
  %vm230 = vcmask 1044480
  %v232 = vsel %vm230, %v69, 0
  %234 = vmatprep.subr.mxu0 0.0
  %235 = vmatpush1.msra.mxu0 %v232
  %236 = vmatprep.subr.mxu0 0.0
  %237 = vmatpush1.msra.mxu0 0.0
  %238 = vmatprep.subr.mxu0 0.0
  %239 = vmatpush1.msra.mxu0 0.0
  %240 = vmatprep.subr.mxu0 0.0
  %241 = vmatpush1.msra.mxu0 0.0
  %242 = vmatprep.subr.mxu0 0.0
  %243 = vmatpush1.msra.mxu0 0.0
  %244 = vmatprep.subr.mxu0 0.0
  %245 = vmatpush1.msra.mxu0 0.0
  %246 = vmatprep.subr.mxu0 0.0
  %247 = vmatpush1.msra.mxu0 0.0
  %248 = vmatprep.subr.mxu0 0.0
  %249 = vmatpush1.msra.mxu0 0.0
  %250 = vmatprep.subr.mxu0 0.0
  %251 = vmatpush1.msra.mxu0 0.0
  %252 = vmatprep.subr.mxu0 0.0
  %253 = vmatpush1.msra.mxu0 0.0
  %254 = vmatprep.subr.mxu0 0.0
  %255 = vmatpush1.msra.mxu0 0.0
  %256 = vmatprep.subr.mxu0 0.0
  %257 = vmatpush1.msra.mxu0 0.0
  %258 = vmatprep.subr.mxu0 0.0
  %259 = vmatpush1.msra.mxu0 0.0
  %260 = vmatprep.subr.mxu0 0.0
  %261 = vmatpush1.msra.mxu0 0.0
  %262 = vmatprep.subr.mxu0 0.0
  %263 = vmatpush1.msra.mxu0 0.0
  %264 = vmatprep.subr.mxu0 0.0
  %265 = vmatpush1.msra.mxu0 0.0
  %266 = vmatprep.subr.mxu0 0.0
  %267 = vmatpush1.msra.mxu0 0.0
  %268 = vmatprep.subr.mxu0 0.0
  %269 = vmatpush1.msra.mxu0 0.0
  %270 = vmatprep.subr.mxu0 0.0
  %271 = vmatpush1.msra.mxu0 0.0
  %272 = vmatprep.subr.mxu0 0.0
  %273 = vmatpush1.msra.mxu0 0.0
  %274 = vmatprep.subr.mxu0 0.0
  %275 = vmatpush1.msra.mxu0 0.0
  %276 = vmatprep.subr.mxu0 0.0
  %277 = vmatpush1.msra.mxu0 0.0
  %278 = vmatprep.subr.mxu0 0.0
  %279 = vmatpush1.msra.mxu0 0.0
  %280 = vmatprep.subr.mxu0 0.0
  %281 = vmatpush1.msra.mxu0 0.0
  %282 = vmatprep.subr.mxu0 0.0
  %283 = vmatpush1.msra.mxu0 0.0
  %284 = vmatprep.subr.mxu0 0.0
  %285 = vmatpush1.msra.mxu0 0.0
  %286 = vmatprep.subr.mxu0 0.0
  %287 = vmatpush1.msra.mxu0 0.0
  %288 = vmatprep.subr.mxu0 0.0
  %289 = vmatpush1.msra.mxu0 0.0
  %290 = vmatprep.subr.mxu0 0.0
  %291 = vmatpush1.msra.mxu0 0.0
  %292 = vmatprep.subr.mxu0 0.0
  %293 = vmatpush1.msra.mxu0 0.0
  %294 = vmatprep.subr.mxu0 0.0
  %295 = vmatpush1.msra.mxu0 0.0
  %296 = vmatprep.subr.mxu0 0.0
  %297 = vmatpush1.msra.mxu0 0.0
  %298 = vmatprep.mubr.f32.mxu0 0.0
  %299 = vmatmul.mubr.f32.gmra.mrb[0].mxu0 %v207
  %v300 = vpop.f32.mrb[0].mxu0
  %v301 = vadd.f32 %v167, %v300
  %v302 = vpop.f32.mrb[0].mxu0
  %303 = vmatprep.mubr.f32.mxu0 0.0
  %304 = vmatmul.mubr.f32.gmra.mrb[0].mxu0 %v210
  %v305 = vpop.f32.mrb[0].mxu0
  %v306 = vadd.f32 %v172, %v305
  %v307 = vpop.f32.mrb[0].mxu0
  %308 = vmatprep.mubr.f32.mxu0 0.0
  %309 = vmatmul.mubr.f32.gmra.mrb[0].mxu0 %v213
  %v310 = vpop.f32.mrb[0].mxu0
  %v311 = vadd.f32 %v177, %v310
  %v312 = vpop.f32.mrb[0].mxu0
  %313 = vmatprep.mubr.f32.mxu0 0.0
  %314 = vmatmul.mubr.f32.gmra.mrb[0].mxu0 %v216
  %v315 = vpop.f32.mrb[0].mxu0
  %v316 = vadd.f32 %v182, %v315
  %v317 = vpop.f32.mrb[0].mxu0
  %318 = vmatprep.mubr.f32.mxu0 0.0
  %319 = vmatmul.mubr.f32.gmra.mrb[0].mxu0 %v219
  %v320 = vpop.f32.mrb[0].mxu0
  %v321 = vadd.f32 %v187, %v320
  %v322 = vpop.f32.mrb[0].mxu0
  %323 = vmatprep.mubr.f32.mxu0 0.0
  %324 = vmatmul.mubr.f32.gmra.mrb[0].mxu0 %v222
  %v325 = vpop.f32.mrb[0].mxu0
  %v326 = vadd.f32 %v192, %v325
  %v327 = vpop.f32.mrb[0].mxu0
  %328 = vmatprep.mubr.f32.mxu0 0.0
  %329 = vmatmul.mubr.f32.gmra.mrb[0].mxu0 %v225
  %v330 = vpop.f32.mrb[0].mxu0
  %v331 = vadd.f32 %v197, %v330
  %v332 = vpop.f32.mrb[0].mxu0
  %333 = vmatprep.mubr.f32.mxu0 0.0
  %334 = vmatmul.mubr.f32.gmra.mrb[0].mxu0 %v228
  %v335 = vpop.f32.mrb[0].mxu0
  %v336 = vadd.f32 %v202, %v335
  %v337 = vpop.f32.mrb[0].mxu0
  %338 = vdwg.mxu0
  %v339 = vld [vmem:[%s4] sm:$0x1]
  %v341 = vlaneseq
  %v342 = vshrl.u32 %v341, 7
  %v343 = vsub.s32 0, %v342
  %v344 = vrot.slane %v339, %v343
  %v346 = vadd.f32 %v301, %v344
  %v347 = vadd.f32 %v306, %v344
  %v348 = vadd.f32 %v311, %v344
  %v349 = vadd.f32 %v316, %v344
  %v350 = vadd.f32 %v321, %v344
  %v351 = vadd.f32 %v326, %v344
  %v352 = vadd.f32 %v331, %v344
  %v353 = vadd.f32 %v336, %v344
  %v354 = vmax.f32 %v346, 0.0
  %v355 = vmax.f32 %v347, 0.0
  %v356 = vmax.f32 %v348, 0.0
  %v357 = vmax.f32 %v349, 0.0
  %v358 = vmax.f32 %v350, 0.0
  %v359 = vmax.f32 %v351, 0.0
  %v360 = vmax.f32 %v352, 0.0
  %v361 = vmax.f32 %v353, 0.0
  %v362 = vld [vmem:[%s5] sm:$0xff]
  %v363 = vld [vmem:[%s5 + $0x8] sm:$0xff]
  %v364 = vld [vmem:[%s5 + $0x10] sm:$0xff]
  %v365 = vld [vmem:[%s5 + $0x18] sm:$0xff]
  %v366 = vld [vmem:[%s6] sm:$0x1]
  %v368 = vlaneseq
  %v369 = vshrl.u32 %v368, 7
  %v370 = vsub.s32 0, %v369
  %v371 = vrot.slane %v366, %v370
  %vm373 = vcmask 261120
  %v375 = vsel %vm373, %v354, 0
  %v378 = vsel %vm373, %v355, 0
  %v381 = vsel %vm373, %v356, 0
  %v384 = vsel %vm373, %v357, 0
  %v387 = vsel %vm373, %v358, 0
  %v390 = vsel %vm373, %v359, 0
  %v393 = vsel %vm373, %v360, 0
  %v396 = vsel %vm373, %v361, 0
  %398 = vmatprep.subr.mxu0 0.0
  %399 = vmatpush1.msra.mxu0 %v362
  %400 = vmatprep.subr.mxu0 0.0
  %401 = vmatpush1.msra.mxu0 %v363
  %402 = vmatprep.subr.mxu0 0.0
  %403 = vmatpush1.msra.mxu0 %v364
  %404 = vmatprep.subr.mxu0 0.0
  %405 = vmatpush1.msra.mxu0 %v365
  %406 = vmatprep.subr.mxu0 0.0
  %407 = vmatpush1.msra.mxu0 0.0
  %408 = vmatprep.subr.mxu0 0.0
  %409 = vmatpush1.msra.mxu0 0.0
  %410 = vmatprep.subr.mxu0 0.0
  %411 = vmatpush1.msra.mxu0 0.0
  %412 = vmatprep.subr.mxu0 0.0
  %413 = vmatpush1.msra.mxu0 0.0
  %414 = vmatprep.subr.mxu0 0.0
  %415 = vmatpush1.msra.mxu0 0.0
  %416 = vmatprep.subr.mxu0 0.0
  %417 = vmatpush1.msra.mxu0 0.0
  %418 = vmatprep.subr.mxu0 0.0
  %419 = vmatpush1.msra.mxu0 0.0
  %420 = vmatprep.subr.mxu0 0.0
  %421 = vmatpush1.msra.mxu0 0.0
  %422 = vmatprep.subr.mxu0 0.0
  %423 = vmatpush1.msra.mxu0 0.0
  %424 = vmatprep.subr.mxu0 0.0
  %425 = vmatpush1.msra.mxu0 0.0
  %426 = vmatprep.subr.mxu0 0.0
  %427 = vmatpush1.msra.mxu0 0.0
  %428 = vmatprep.subr.mxu0 0.0
  %429 = vmatpush1.msra.mxu0 0.0
  %430 = vmatprep.subr.mxu0 0.0
  %431 = vmatpush1.msra.mxu0 0.0
  %432 = vmatprep.subr.mxu0 0.0
  %433 = vmatpush1.msra.mxu0 0.0
  %434 = vmatprep.subr.mxu0 0.0
  %435 = vmatpush1.msra.mxu0 0.0
  %436 = vmatprep.subr.mxu0 0.0
  %437 = vmatpush1.msra.mxu0 0.0
  %438 = vmatprep.subr.mxu0 0.0
  %439 = vmatpush1.msra.mxu0 0.0
  %440 = vmatprep.subr.mxu0 0.0
  %441 = vmatpush1.msra.mxu0 0.0
  %442 = vmatprep.subr.mxu0 0.0
  %443 = vmatpush1.msra.mxu0 0.0
  %444 = vmatprep.subr.mxu0 0.0
  %445 = vmatpush1.msra.mxu0 0.0
  %446 = vmatprep.subr.mxu0 0.0
  %447 = vmatpush1.msra.mxu0 0.0
  %448 = vmatprep.subr.mxu0 0.0
  %449 = vmatpush1.msra.mxu0 0.0
  %450 = vmatprep.subr.mxu0 0.0
  %451 = vmatpush1.msra.mxu0 0.0
  %452 = vmatprep.subr.mxu0 0.0
  %453 = vmatpush1.msra.mxu0 0.0
  %454 = vmatprep.subr.mxu0 0.0
  %455 = vmatpush1.msra.mxu0 0.0
  %456 = vmatprep.subr.mxu0 0.0
  %457 = vmatpush1.msra.mxu0 0.0
  %458 = vmatprep.subr.mxu0 0.0
  %459 = vmatpush1.msra.mxu0 0.0
  %460 = vmatprep.subr.mxu0 0.0
  %461 = vmatpush1.msra.mxu0 0.0
  %462 = vmatprep.mubr.f32.mxu0 0.0
  %463 = vmatmul.mubr.f32.gmra.mrb[0].mxu0 %v375
  %v464 = vpop.f32.mrb[0].mxu0
  %v465 = vadd.f32 %v371, %v464
  %v466 = vpop.f32.mrb[0].mxu0
  %467 = vmatprep.mubr.f32.mxu0 0.0
  %468 = vmatmul.mubr.f32.gmra.mrb[0].mxu0 %v378
  %v469 = vpop.f32.mrb[0].mxu0
  %v470 = vadd.f32 %v371, %v469
  %v471 = vpop.f32.mrb[0].mxu0
  %472 = vmatprep.mubr.f32.mxu0 0.0
  %473 = vmatmul.mubr.f32.gmra.mrb[0].mxu0 %v381
  %v474 = vpop.f32.mrb[0].mxu0
  %v475 = vadd.f32 %v371, %v474
  %v476 = vpop.f32.mrb[0].mxu0
  %477 = vmatprep.mubr.f32.mxu0 0.0
  %478 = vmatmul.mubr.f32.gmra.mrb[0].mxu0 %v384
  %v479 = vpop.f32.mrb[0].mxu0
  %v480 = vadd.f32 %v371, %v479
  %v481 = vpop.f32.mrb[0].mxu0
  %482 = vmatprep.mubr.f32.mxu0 0.0
  %483 = vmatmul.mubr.f32.gmra.mrb[0].mxu0 %v387
  %v484 = vpop.f32.mrb[0].mxu0
  %v485 = vadd.f32 %v371, %v484
  %v486 = vpop.f32.mrb[0].mxu0
  %487 = vmatprep.mubr.f32.mxu0 0.0
  %488 = vmatmul.mubr.f32.gmra.mrb[0].mxu0 %v390
  %v489 = vpop.f32.mrb[0].mxu0
  %v490 = vadd.f32 %v371, %v489
  %v491 = vpop.f32.mrb[0].mxu0
  %492 = vmatprep.mubr.f32.mxu0 0.0
  %493 = vmatmul.mubr.f32.gmra.mrb[0].mxu0 %v393
  %v494 = vpop.f32.mrb[0].mxu0
  %v495 = vadd.f32 %v371, %v494
  %v496 = vpop.f32.mrb[0].mxu0
  %497 = vmatprep.mubr.f32.mxu0 0.0
  %498 = vmatmul.mubr.f32.gmra.mrb[0].mxu0 %v396
  %v499 = vpop.f32.mrb[0].mxu0
  %v500 = vadd.f32 %v371, %v499
  %v501 = vpop.f32.mrb[0].mxu0
  %502 = vdwg.mxu0
  %vm503 = vcmask 785408
  %504 = vst.msk [vmem:[#allocation2] sm:$0xff] %vm503, %v465
  %505 = vst.msk [vmem:[#allocation2 + $0x8] sm:$0xff] %vm503, %v470
  %506 = vst.msk [vmem:[#allocation2 + $0x10] sm:$0xff] %vm503, %v475
  %507 = vst.msk [vmem:[#allocation2 + $0x18] sm:$0xff] %vm503, %v480
  %508 = vst.msk [vmem:[#allocation2 + $0x20] sm:$0xff] %vm503, %v485
  %509 = vst.msk [vmem:[#allocation2 + $0x28] sm:$0xff] %vm503, %v490
  %510 = vst.msk [vmem:[#allocation2 + $0x30] sm:$0xff] %vm503, %v495
  %511 = vst.msk [vmem:[#allocation2 + $0x38] sm:$0xff] %vm503, %v500
  %v512 = vld [vmem:[%s7] sm:$0xff]
  %v513 = vld [vmem:[%s7 + $0x8] sm:$0xff]
  %v514 = vld [vmem:[%s7 + $0x10] sm:$0xff]
  %v515 = vld [vmem:[%s7 + $0x18] sm:$0xff]
  %v516 = vld [vmem:[%s8] sm:$0x1]
  %v518 = vlaneseq
  %v519 = vshrl.u32 %v518, 7
  %v520 = vsub.s32 0, %v519
  %v521 = vrot.slane %v516, %v520
  %v523 = vld [vmem:[#allocation2] sm:$0xff]
  %v525 = vsel %vm373, 0.0, 0
  %527 = vmatprep.subr.mxu0 0.0
  %528 = vmatpush1.msra.mxu0 %v512
  %529 = vmatprep.subr.mxu0 0.0
  %530 = vmatpush1.msra.mxu0 %v513
  %531 = vmatprep.subr.mxu0 0.0
  %532 = vmatpush1.msra.mxu0 %v514
  %533 = vmatprep.subr.mxu0 0.0
  %534 = vmatpush1.msra.mxu0 %v515
  %535 = vmatprep.subr.mxu0 0.0
  %536 = vmatpush1.msra.mxu0 0.0
  %537 = vmatprep.subr.mxu0 0.0
  %538 = vmatpush1.msra.mxu0 0.0
  %539 = vmatprep.subr.mxu0 0.0
  %540 = vmatpush1.msra.mxu0 0.0
  %541 = vmatprep.subr.mxu0 0.0
  %542 = vmatpush1.msra.mxu0 0.0
  %543 = vmatprep.subr.mxu0 0.0
  %544 = vmatpush1.msra.mxu0 0.0
  %545 = vmatprep.subr.mxu0 0.0
  %546 = vmatpush1.msra.mxu0 0.0
  %547 = vmatprep.subr.mxu0 0.0
  %548 = vmatpush1.msra.mxu0 0.0
  %549 = vmatprep.subr.mxu0 0.0
  %550 = vmatpush1.msra.mxu0 0.0
  %551 = vmatprep.subr.mxu0 0.0
  %552 = vmatpush1.msra.mxu0 0.0
  %553 = vmatprep.subr.mxu0 0.0
  %554 = vmatpush1.msra.mxu0 0.0
  %555 = vmatprep.subr.mxu0 0.0
  %556 = vmatpush1.msra.mxu0 0.0
  %557 = vmatprep.subr.mxu0 0.0
  %558 = vmatpush1.msra.mxu0 0.0
  %559 = vmatprep.subr.mxu0 0.0
  %560 = vmatpush1.msra.mxu0 0.0
  %561 = vmatprep.subr.mxu0 0.0
  %562 = vmatpush1.msra.mxu0 0.0
  %563 = vmatprep.subr.mxu0 0.0
  %564 = vmatpush1.msra.mxu0 0.0
  %565 = vmatprep.subr.mxu0 0.0
  %566 = vmatpush1.msra.mxu0 0.0
  %567 = vmatprep.subr.mxu0 0.0
  %568 = vmatpush1.msra.mxu0 0.0
  %569 = vmatprep.subr.mxu0 0.0
  %570 = vmatpush1.msra.mxu0 0.0
  %571 = vmatprep.subr.mxu0 0.0
  %572 = vmatpush1.msra.mxu0 0.0
  %573 = vmatprep.subr.mxu0 0.0
  %574 = vmatpush1.msra.mxu0 0.0
  %575 = vmatprep.subr.mxu0 0.0
  %576 = vmatpush1.msra.mxu0 0.0
  %577 = vmatprep.subr.mxu0 0.0
  %578 = vmatpush1.msra.mxu0 0.0
  %579 = vmatprep.subr.mxu0 0.0
  %580 = vmatpush1.msra.mxu0 0.0
  %581 = vmatprep.subr.mxu0 0.0
  %582 = vmatpush1.msra.mxu0 0.0
  %583 = vmatprep.subr.mxu0 0.0
  %584 = vmatpush1.msra.mxu0 0.0
  %585 = vmatprep.subr.mxu0 0.0
  %586 = vmatpush1.msra.mxu0 0.0
  %587 = vmatprep.subr.mxu0 0.0
  %588 = vmatpush1.msra.mxu0 0.0
  %589 = vmatprep.subr.mxu0 0.0
  %590 = vmatpush1.msra.mxu0 0.0
  %591 = vmatprep.mubr.f32.mxu0 0.0
  %592 = vmatmul.mubr.f32.gmra.mrb[0].mxu0 %v525
  %v593 = vpop.f32.mrb[0].mxu0
  %v594 = vadd.f32 %v521, %v593
  %v595 = vpop.f32.mrb[0].mxu0
  %596 = vdwg.mxu0
  %v597 = vadd.f32 %v523, %v594
  %v598 = vxor.u32 %v597, 2147483648
  %v599 = vmul.f32 %v598, 1.442695
  %v600 = vpow.pop %v599
  %v601 = vadd.f32 %v600, 1.0
  %v602 = vrcp.pop %v601
  %v603 = vmul.f32 1.0, %v602
  %605 = vrot.lane.b32.xlu0 %v594, 64
  %v606 = vpop.permute.xlu0 %605
  %v608 = vmul.f32 %v603, %v606
  %610 = vrot.lane.b32.xlu0 %v608, 64
  %v611 = vpop.permute.xlu0 %610
  %v613 = vadd.f32 %v523, %v611
  %v614 = vtanh.pop %v613
  %v615 = vsub.f32 1.0, %v603
  %617 = vrot.lane.b32.xlu0 %v614, 96
  %v618 = vpop.permute.xlu0 %617
  %v620 = vmul.f32 %v615, %v618
  %v621 = vmul.f32 %v603, 0.0
  %v622 = vadd.f32 %v620, %v621
  %s623 = scalar_lea.vmem [#allocation2], 8
  %v624 = vld [vmem:[%s623] sm:$0xff]
  %626 = vrot.lane.b32.xlu0 %v622, 96
  %v627 = vpop.permute.xlu0 %626
  %v628 = vsel %vm373, %v627, 0
  %630 = vmatprep.subr.mxu0 0.0
  %631 = vmatpush1.msra.mxu0 %v512
  %632 = vmatprep.subr.mxu0 0.0
  %633 = vmatpush1.msra.mxu0 %v513
  %634 = vmatprep.subr.mxu0 0.0
  %635 = vmatpush1.msra.mxu0 %v514
  %636 = vmatprep.subr.mxu0 0.0
  %637 = vmatpush1.msra.mxu0 %v515
  %638 = vmatprep.subr.mxu0 0.0
  %639 = vmatpush1.msra.mxu0 0.0
  %640 = vmatprep.subr.mxu0 0.0
  %641 = vmatpush1.msra.mxu0 0.0
  %642 = vmatprep.subr.mxu0 0.0
  %643 = vmatpush1.msra.mxu0 0.0
  %644 = vmatprep.subr.mxu0 0.0
  %645 = vmatpush1.msra.mxu0 0.0
  %646 = vmatprep.subr.mxu0 0.0
  %647 = vmatpush1.msra.mxu0 0.0
  %648 = vmatprep.subr.mxu0 0.0
  %649 = vmatpush1.msra.mxu0 0.0
  %650 = vmatprep.subr.mxu0 0.0
  %651 = vmatpush1.msra.mxu0 0.0
  %652 = vmatprep.subr.mxu0 0.0
  %653 = vmatpush1.msra.mxu0 0.0
  %654 = vmatprep.subr.mxu0 0.0
  %655 = vmatpush1.msra.mxu0 0.0
  %656 = vmatprep.subr.mxu0 0.0
  %657 = vmatpush1.msra.mxu0 0.0
  %658 = vmatprep.subr.mxu0 0.0
  %659 = vmatpush1.msra.mxu0 0.0
  %660 = vmatprep.subr.mxu0 0.0
  %661 = vmatpush1.msra.mxu0 0.0
  %662 = vmatprep.subr.mxu0 0.0
  %663 = vmatpush1.msra.mxu0 0.0
  %664 = vmatprep.subr.mxu0 0.0
  %665 = vmatpush1.msra.mxu0 0.0
  %666 = vmatprep.subr.mxu0 0.0
  %667 = vmatpush1.msra.mxu0 0.0
  %668 = vmatprep.subr.mxu0 0.0
  %669 = vmatpush1.msra.mxu0 0.0
  %670 = vmatprep.subr.mxu0 0.0
  %671 = vmatpush1.msra.mxu0 0.0
  %672 = vmatprep.subr.mxu0 0.0
  %673 = vmatpush1.msra.mxu0 0.0
  %674 = vmatprep.subr.mxu0 0.0
  %675 = vmatpush1.msra.mxu0 0.0
  %676 = vmatprep.subr.mxu0 0.0
  %677 = vmatpush1.msra.mxu0 0.0
  %678 = vmatprep.subr.mxu0 0.0
  %679 = vmatpush1.msra.mxu0 0.0
  %680 = vmatprep.subr.mxu0 0.0
  %681 = vmatpush1.msra.mxu0 0.0
  %682 = vmatprep.subr.mxu0 0.0
  %683 = vmatpush1.msra.mxu0 0.0
  %684 = vmatprep.subr.mxu0 0.0
  %685 = vmatpush1.msra.mxu0 0.0
  %686 = vmatprep.subr.mxu0 0.0
  %687 = vmatpush1.msra.mxu0 0.0
  %688 = vmatprep.subr.mxu0 0.0
  %689 = vmatpush1.msra.mxu0 0.0
  %690 = vmatprep.subr.mxu0 0.0
  %691 = vmatpush1.msra.mxu0 0.0
  %692 = vmatprep.subr.mxu0 0.0
  %693 = vmatpush1.msra.mxu0 0.0
  %694 = vmatprep.mubr.f32.mxu0 0.0
  %695 = vmatmul.mubr.f32.gmra.mrb[0].mxu0 %v628
  %v696 = vpop.f32.mrb[0].mxu0
  %v697 = vadd.f32 %v521, %v696
  %v698 = vpop.f32.mrb[0].mxu0
  %699 = vdwg.mxu0
  %v700 = vadd.f32 %v624, %v697
  %v701 = vxor.u32 %v700, 2147483648
  %v702 = vmul.f32 %v701, 1.442695
  %v703 = vpow.pop %v702
  %v704 = vadd.f32 %v703, 1.0
  %v705 = vrcp.pop %v704
  %v706 = vmul.f32 1.0, %v705
  %708 = vrot.lane.b32.xlu0 %v697, 64
  %v709 = vpop.permute.xlu0 %708
  %v711 = vmul.f32 %v706, %v709
  %713 = vrot.lane.b32.xlu0 %v711, 64
  %v714 = vpop.permute.xlu0 %713
  %v716 = vadd.f32 %v624, %v714
  %v717 = vtanh.pop %v716
  %v718 = vsub.f32 1.0, %v706
  %720 = vrot.lane.b32.xlu0 %v717, 96
  %v721 = vpop.permute.xlu0 %720
  %v723 = vmul.f32 %v718, %v721
  %v724 = vmul.f32 %v706, %v622
  %v725 = vadd.f32 %v723, %v724
  %s726 = scalar_lea.vmem [#allocation2], 16
  %v727 = vld [vmem:[%s726] sm:$0xff]
  %729 = vrot.lane.b32.xlu0 %v725, 96
  %v730 = vpop.permute.xlu0 %729
  %v731 = vsel %vm373, %v730, 0
  %733 = vmatprep.subr.mxu0 0.0
  %734 = vmatpush1.msra.mxu0 %v512
  %735 = vmatprep.subr.mxu0 0.0
  %736 = vmatpush1.msra.mxu0 %v513
  %737 = vmatprep.subr.mxu0 0.0
  %738 = vmatpush1.msra.mxu0 %v514
  %739 = vmatprep.subr.mxu0 0.0
  %740 = vmatpush1.msra.mxu0 %v515
  %741 = vmatprep.subr.mxu0 0.0
  %742 = vmatpush1.msra.mxu0 0.0
  %743 = vmatprep.subr.mxu0 0.0
  %744 = vmatpush1.msra.mxu0 0.0
  %745 = vmatprep.subr.mxu0 0.0
  %746 = vmatpush1.msra.mxu0 0.0
  %747 = vmatprep.subr.mxu0 0.0
  %748 = vmatpush1.msra.mxu0 0.0
  %749 = vmatprep.subr.mxu0 0.0
  %750 = vmatpush1.msra.mxu0 0.0
  %751 = vmatprep.subr.mxu0 0.0
  %752 = vmatpush1.msra.mxu0 0.0
  %753 = vmatprep.subr.mxu0 0.0
  %754 = vmatpush1.msra.mxu0 0.0
  %755 = vmatprep.subr.mxu0 0.0
  %756 = vmatpush1.msra.mxu0 0.0
  %757 = vmatprep.subr.mxu0 0.0
  %758 = vmatpush1.msra.mxu0 0.0
  %759 = vmatprep.subr.mxu0 0.0
  %760 = vmatpush1.msra.mxu0 0.0
  %761 = vmatprep.subr.mxu0 0.0
  %762 = vmatpush1.msra.mxu0 0.0
  %763 = vmatprep.subr.mxu0 0.0
  %764 = vmatpush1.msra.mxu0 0.0
  %765 = vmatprep.subr.mxu0 0.0
  %766 = vmatpush1.msra.mxu0 0.0
  %767 = vmatprep.subr.mxu0 0.0
  %768 = vmatpush1.msra.mxu0 0.0
  %769 = vmatprep.subr.mxu0 0.0
  %770 = vmatpush1.msra.mxu0 0.0
  %771 = vmatprep.subr.mxu0 0.0
  %772 = vmatpush1.msra.mxu0 0.0
  %773 = vmatprep.subr.mxu0 0.0
  %774 = vmatpush1.msra.mxu0 0.0
  %775 = vmatprep.subr.mxu0 0.0
  %776 = vmatpush1.msra.mxu0 0.0
  %777 = vmatprep.subr.mxu0 0.0
  %778 = vmatpush1.msra.mxu0 0.0
  %779 = vmatprep.subr.mxu0 0.0
  %780 = vmatpush1.msra.mxu0 0.0
  %781 = vmatprep.subr.mxu0 0.0
  %782 = vmatpush1.msra.mxu0 0.0
  %783 = vmatprep.subr.mxu0 0.0
  %784 = vmatpush1.msra.mxu0 0.0
  %785 = vmatprep.subr.mxu0 0.0
  %786 = vmatpush1.msra.mxu0 0.0
  %787 = vmatprep.subr.mxu0 0.0
  %788 = vmatpush1.msra.mxu0 0.0
  %789 = vmatprep.subr.mxu0 0.0
  %790 = vmatpush1.msra.mxu0 0.0
  %791 = vmatprep.subr.mxu0 0.0
  %792 = vmatpush1.msra.mxu0 0.0
  %793 = vmatprep.subr.mxu0 0.0
  %794 = vmatpush1.msra.mxu0 0.0
  %795 = vmatprep.subr.mxu0 0.0
  %796 = vmatpush1.msra.mxu0 0.0
  %797 = vmatprep.mubr.f32.mxu0 0.0
  %798 = vmatmul.mubr.f32.gmra.mrb[0].mxu0 %v731
  %v799 = vpop.f32.mrb[0].mxu0
  %v800 = vadd.f32 %v521, %v799
  %v801 = vpop.f32.mrb[0].mxu0
  %802 = vdwg.mxu0
  %v803 = vadd.f32 %v727, %v800
  %v804 = vxor.u32 %v803, 2147483648
  %v805 = vmul.f32 %v804, 1.442695
  %v806 = vpow.pop %v805
  %v807 = vadd.f32 %v806, 1.0
  %v808 = vrcp.pop %v807
  %v809 = vmul.f32 1.0, %v808
  %811 = vrot.lane.b32.xlu0 %v800, 64
  %v812 = vpop.permute.xlu0 %811
  %v814 = vmul.f32 %v809, %v812
  %816 = vrot.lane.b32.xlu0 %v814, 64
  %v817 = vpop.permute.xlu0 %816
  %v819 = vadd.f32 %v727, %v817
  %v820 = vtanh.pop %v819
  %v821 = vsub.f32 1.0, %v809
  %823 = vrot.lane.b32.xlu0 %v820, 96
  %v824 = vpop.permute.xlu0 %823
  %v826 = vmul.f32 %v821, %v824
  %v827 = vmul.f32 %v809, %v725
  %v828 = vadd.f32 %v826, %v827
  %s829 = scalar_lea.vmem [#allocation2], 24
  %v830 = vld [vmem:[%s829] sm:$0xff]
  %832 = vrot.lane.b32.xlu0 %v828, 96
  %v833 = vpop.permute.xlu0 %832
  %v834 = vsel %vm373, %v833, 0
  %836 = vmatprep.subr.mxu0 0.0
  %837 = vmatpush1.msra.mxu0 %v512
  %838 = vmatprep.subr.mxu0 0.0
  %839 = vmatpush1.msra.mxu0 %v513
  %840 = vmatprep.subr.mxu0 0.0
  %841 = vmatpush1.msra.mxu0 %v514
  %842 = vmatprep.subr.mxu0 0.0
  %843 = vmatpush1.msra.mxu0 %v515
  %844 = vmatprep.subr.mxu0 0.0
  %845 = vmatpush1.msra.mxu0 0.0
  %846 = vmatprep.subr.mxu0 0.0
  %847 = vmatpush1.msra.mxu0 0.0
  %848 = vmatprep.subr.mxu0 0.0
  %849 = vmatpush1.msra.mxu0 0.0
  %850 = vmatprep.subr.mxu0 0.0
  %851 = vmatpush1.msra.mxu0 0.0
  %852 = vmatprep.subr.mxu0 0.0
  %853 = vmatpush1.msra.mxu0 0.0
  %854 = vmatprep.subr.mxu0 0.0
  %855 = vmatpush1.msra.mxu0 0.0
  %856 = vmatprep.subr.mxu0 0.0
  %857 = vmatpush1.msra.mxu0 0.0
  %858 = vmatprep.subr.mxu0 0.0
  %859 = vmatpush1.msra.mxu0 0.0
  %860 = vmatprep.subr.mxu0 0.0
  %861 = vmatpush1.msra.mxu0 0.0
  %862 = vmatprep.subr.mxu0 0.0
  %863 = vmatpush1.msra.mxu0 0.0
  %864 = vmatprep.subr.mxu0 0.0
  %865 = vmatpush1.msra.mxu0 0.0
  %866 = vmatprep.subr.mxu0 0.0
  %867 = vmatpush1.msra.mxu0 0.0
  %868 = vmatprep.subr.mxu0 0.0
  %869 = vmatpush1.msra.mxu0 0.0
  %870 = vmatprep.subr.mxu0 0.0
  %871 = vmatpush1.msra.mxu0 0.0
  %872 = vmatprep.subr.mxu0 0.0
  %873 = vmatpush1.msra.mxu0 0.0
  %874 = vmatprep.subr.mxu0 0.0
  %875 = vmatpush1.msra.mxu0 0.0
  %876 = vmatprep.subr.mxu0 0.0
  %877 = vmatpush1.msra.mxu0 0.0
  %878 = vmatprep.subr.mxu0 0.0
  %879 = vmatpush1.msra.mxu0 0.0
  %880 = vmatprep.subr.mxu0 0.0
  %881 = vmatpush1.msra.mxu0 0.0
  %882 = vmatprep.subr.mxu0 0.0
  %883 = vmatpush1.msra.mxu0 0.0
  %884 = vmatprep.subr.mxu0 0.0
  %885 = vmatpush1.msra.mxu0 0.0
  %886 = vmatprep.subr.mxu0 0.0
  %887 = vmatpush1.msra.mxu0 0.0
  %888 = vmatprep.subr.mxu0 0.0
  %889 = vmatpush1.msra.mxu0 0.0
  %890 = vmatprep.subr.mxu0 0.0
  %891 = vmatpush1.msra.mxu0 0.0
  %892 = vmatprep.subr.mxu0 0.0
  %893 = vmatpush1.msra.mxu0 0.0
  %894 = vmatprep.subr.mxu0 0.0
  %895 = vmatpush1.msra.mxu0 0.0
  %896 = vmatprep.subr.mxu0 0.0
  %897 = vmatpush1.msra.mxu0 0.0
  %898 = vmatprep.subr.mxu0 0.0
  %899 = vmatpush1.msra.mxu0 0.0
  %900 = vmatprep.mubr.f32.mxu0 0.0
  %901 = vmatmul.mubr.f32.gmra.mrb[0].mxu0 %v834
  %v902 = vpop.f32.mrb[0].mxu0
  %v903 = vadd.f32 %v521, %v902
  %v904 = vpop.f32.mrb[0].mxu0
  %905 = vdwg.mxu0
  %v906 = vadd.f32 %v830, %v903
  %v907 = vxor.u32 %v906, 2147483648
  %v908 = vmul.f32 %v907, 1.442695
  %v909 = vpow.pop %v908
  %v910 = vadd.f32 %v909, 1.0
  %v911 = vrcp.pop %v910
  %v912 = vmul.f32 1.0, %v911
  %914 = vrot.lane.b32.xlu0 %v903, 64
  %v915 = vpop.permute.xlu0 %914
  %v917 = vmul.f32 %v912, %v915
  %919 = vrot.lane.b32.xlu0 %v917, 64
  %v920 = vpop.permute.xlu0 %919
  %v922 = vadd.f32 %v830, %v920
  %v923 = vtanh.pop %v922
  %v924 = vsub.f32 1.0, %v912
  %926 = vrot.lane.b32.xlu0 %v923, 96
  %v927 = vpop.permute.xlu0 %926
  %v929 = vmul.f32 %v924, %v927
  %v930 = vmul.f32 %v912, %v828
  %v931 = vadd.f32 %v929, %v930
  %s932 = scalar_lea.vmem [#allocation2], 32
  %v933 = vld [vmem:[%s932] sm:$0xff]
  %935 = vrot.lane.b32.xlu0 %v931, 96
  %v936 = vpop.permute.xlu0 %935
  %v937 = vsel %vm373, %v936, 0
  %939 = vmatprep.subr.mxu0 0.0
  %940 = vmatpush1.msra.mxu0 %v512
  %941 = vmatprep.subr.mxu0 0.0
  %942 = vmatpush1.msra.mxu0 %v513
  %943 = vmatprep.subr.mxu0 0.0
  %944 = vmatpush1.msra.mxu0 %v514
  %945 = vmatprep.subr.mxu0 0.0
  %946 = vmatpush1.msra.mxu0 %v515
  %947 = vmatprep.subr.mxu0 0.0
  %948 = vmatpush1.msra.mxu0 0.0
  %949 = vmatprep.subr.mxu0 0.0
  %950 = vmatpush1.msra.mxu0 0.0
  %951 = vmatprep.subr.mxu0 0.0
  %952 = vmatpush1.msra.mxu0 0.0
  %953 = vmatprep.subr.mxu0 0.0
  %954 = vmatpush1.msra.mxu0 0.0
  %955 = vmatprep.subr.mxu0 0.0
  %956 = vmatpush1.msra.mxu0 0.0
  %957 = vmatprep.subr.mxu0 0.0
  %958 = vmatpush1.msra.mxu0 0.0
  %959 = vmatprep.subr.mxu0 0.0
  %960 = vmatpush1.msra.mxu0 0.0
  %961 = vmatprep.subr.mxu0 0.0
  %962 = vmatpush1.msra.mxu0 0.0
  %963 = vmatprep.subr.mxu0 0.0
  %964 = vmatpush1.msra.mxu0 0.0
  %965 = vmatprep.subr.mxu0 0.0
  %966 = vmatpush1.msra.mxu0 0.0
  %967 = vmatprep.subr.mxu0 0.0
  %968 = vmatpush1.msra.mxu0 0.0
  %969 = vmatprep.subr.mxu0 0.0
  %970 = vmatpush1.msra.mxu0 0.0
  %971 = vmatprep.subr.mxu0 0.0
  %972 = vmatpush1.msra.mxu0 0.0
  %973 = vmatprep.subr.mxu0 0.0
  %974 = vmatpush1.msra.mxu0 0.0
  %975 = vmatprep.subr.mxu0 0.0
  %976 = vmatpush1.msra.mxu0 0.0
  %977 = vmatprep.subr.mxu0 0.0
  %978 = vmatpush1.msra.mxu0 0.0
  %979 = vmatprep.subr.mxu0 0.0
  %980 = vmatpush1.msra.mxu0 0.0
  %981 = vmatprep.subr.mxu0 0.0
  %982 = vmatpush1.msra.mxu0 0.0
  %983 = vmatprep.subr.mxu0 0.0
  %984 = vmatpush1.msra.mxu0 0.0
  %985 = vmatprep.subr.mxu0 0.0
  %986 = vmatpush1.msra.mxu0 0.0
  %987 = vmatprep.subr.mxu0 0.0
  %988 = vmatpush1.msra.mxu0 0.0
  %989 = vmatprep.subr.mxu0 0.0
  %990 = vmatpush1.msra.mxu0 0.0
  %991 = vmatprep.subr.mxu0 0.0
  %992 = vmatpush1.msra.mxu0 0.0
  %993 = vmatprep.subr.mxu0 0.0
  %994 = vmatpush1.msra.mxu0 0.0
  %995 = vmatprep.subr.mxu0 0.0
  %996 = vmatpush1.msra.mxu0 0.0
  %997 = vmatprep.subr.mxu0 0.0
  %998 = vmatpush1.msra.mxu0 0.0
  %999 = vmatprep.subr.mxu0 0.0
  %1000 = vmatpush1.msra.mxu0 0.0
  %1001 = vmatprep.subr.mxu0 0.0
  %1002 = vmatpush1.msra.mxu0 0.0
  %1003 = vmatprep.mubr.f32.mxu0 0.0
  %1004 = vmatmul.mubr.f32.gmra.mrb[0].mxu0 %v937
  %v1005 = vpop.f32.mrb[0].mxu0
  %v1006 = vadd.f32 %v521, %v1005
  %v1007 = vpop.f32.mrb[0].mxu0
  %1008 = vdwg.mxu0
  %v1009 = vadd.f32 %v933, %v1006
  %v1010 = vxor.u32 %v1009, 2147483648
  %v1011 = vmul.f32 %v1010, 1.442695
  %v1012 = vpow.pop %v1011
  %v1013 = vadd.f32 %v1012, 1.0
  %v1014 = vrcp.pop %v1013
  %v1015 = vmul.f32 1.0, %v1014
  %1017 = vrot.lane.b32.xlu0 %v1006, 64
  %v1018 = vpop.permute.xlu0 %1017
  %v1020 = vmul.f32 %v1015, %v1018
  %1022 = vrot.lane.b32.xlu0 %v1020, 64
  %v1023 = vpop.permute.xlu0 %1022
  %v1025 = vadd.f32 %v933, %v1023
  %v1026 = vtanh.pop %v1025
  %v1027 = vsub.f32 1.0, %v1015
  %1029 = vrot.lane.b32.xlu0 %v1026, 96
  %v1030 = vpop.permute.xlu0 %1029
  %v1032 = vmul.f32 %v1027, %v1030
  %v1033 = vmul.f32 %v1015, %v931
  %v1034 = vadd.f32 %v1032, %v1033
  %s1035 = scalar_lea.vmem [#allocation2], 40
  %v1036 = vld [vmem:[%s1035] sm:$0xff]
  %1038 = vrot.lane.b32.xlu0 %v1034, 96
  %v1039 = vpop.permute.xlu0 %1038
  %v1040 = vsel %vm373, %v1039, 0
  %1042 = vmatprep.subr.mxu0 0.0
  %1043 = vmatpush1.msra.mxu0 %v512
  %1044 = vmatprep.subr.mxu0 0.0
  %1045 = vmatpush1.msra.mxu0 %v513
  %1046 = vmatprep.subr.mxu0 0.0
  %1047 = vmatpush1.msra.mxu0 %v514
  %1048 = vmatprep.subr.mxu0 0.0
  %1049 = vmatpush1.msra.mxu0 %v515
  %1050 = vmatprep.subr.mxu0 0.0
  %1051 = vmatpush1.msra.mxu0 0.0
  %1052 = vmatprep.subr.mxu0 0.0
  %1053 = vmatpush1.msra.mxu0 0.0
  %1054 = vmatprep.subr.mxu0 0.0
  %1055 = vmatpush1.msra.mxu0 0.0
  %1056 = vmatprep.subr.mxu0 0.0
  %1057 = vmatpush1.msra.mxu0 0.0
  %1058 = vmatprep.subr.mxu0 0.0
  %1059 = vmatpush1.msra.mxu0 0.0
  %1060 = vmatprep.subr.mxu0 0.0
  %1061 = vmatpush1.msra.mxu0 0.0
  %1062 = vmatprep.subr.mxu0 0.0
  %1063 = vmatpush1.msra.mxu0 0.0
  %1064 = vmatprep.subr.mxu0 0.0
  %1065 = vmatpush1.msra.mxu0 0.0
  %1066 = vmatprep.subr.mxu0 0.0
  %1067 = vmatpush1.msra.mxu0 0.0
  %1068 = vmatprep.subr.mxu0 0.0
  %1069 = vmatpush1.msra.mxu0 0.0
  %1070 = vmatprep.subr.mxu0 0.0
  %1071 = vmatpush1.msra.mxu0 0.0
  %1072 = vmatprep.subr.mxu0 0.0
  %1073 = vmatpush1.msra.mxu0 0.0
  %1074 = vmatprep.subr.mxu0 0.0
  %1075 = vmatpush1.msra.mxu0 0.0
  %1076 = vmatprep.subr.mxu0 0.0
  %1077 = vmatpush1.msra.mxu0 0.0
  %1078 = vmatprep.subr.mxu0 0.0
  %1079 = vmatpush1.msra.mxu0 0.0
  %1080 = vmatprep.subr.mxu0 0.0
  %1081 = vmatpush1.msra.mxu0 0.0
  %1082 = vmatprep.subr.mxu0 0.0
  %1083 = vmatpush1.msra.mxu0 0.0
  %1084 = vmatprep.subr.mxu0 0.0
  %1085 = vmatpush1.msra.mxu0 0.0
  %1086 = vmatprep.subr.mxu0 0.0
  %1087 = vmatpush1.msra.mxu0 0.0
  %1088 = vmatprep.subr.mxu0 0.0
  %1089 = vmatpush1.msra.mxu0 0.0
  %1090 = vmatprep.subr.mxu0 0.0
  %1091 = vmatpush1.msra.mxu0 0.0
  %1092 = vmatprep.subr.mxu0 0.0
  %1093 = vmatpush1.msra.mxu0 0.0
  %1094 = vmatprep.subr.mxu0 0.0
  %1095 = vmatpush1.msra.mxu0 0.0
  %1096 = vmatprep.subr.mxu0 0.0
  %1097 = vmatpush1.msra.mxu0 0.0
  %1098 = vmatprep.subr.mxu0 0.0
  %1099 = vmatpush1.msra.mxu0 0.0
  %1100 = vmatprep.subr.mxu0 0.0
  %1101 = vmatpush1.msra.mxu0 0.0
  %1102 = vmatprep.subr.mxu0 0.0
  %1103 = vmatpush1.msra.mxu0 0.0
  %1104 = vmatprep.subr.mxu0 0.0
  %1105 = vmatpush1.msra.mxu0 0.0
  %1106 = vmatprep.mubr.f32.mxu0 0.0
  %1107 = vmatmul.mubr.f32.gmra.mrb[0].mxu0 %v1040
  %v1108 = vpop.f32.mrb[0].mxu0
  %v1109 = vadd.f32 %v521, %v1108
  %v1110 = vpop.f32.mrb[0].mxu0
  %1111 = vdwg.mxu0
  %v1112 = vadd.f32 %v1036, %v1109
  %v1113 = vxor.u32 %v1112, 2147483648
  %v1114 = vmul.f32 %v1113, 1.442695
  %v1115 = vpow.pop %v1114
  %v1116 = vadd.f32 %v1115, 1.0
  %v1117 = vrcp.pop %v1116
  %v1118 = vmul.f32 1.0, %v1117
  %1120 = vrot.lane.b32.xlu0 %v1109, 64
  %v1121 = vpop.permute.xlu0 %1120
  %v1123 = vmul.f32 %v1118, %v1121
  %1125 = vrot.lane.b32.xlu0 %v1123, 64
  %v1126 = vpop.permute.xlu0 %1125
  %v1128 = vadd.f32 %v1036, %v1126
  %v1129 = vtanh.pop %v1128
  %v1130 = vsub.f32 1.0, %v1118
  %1132 = vrot.lane.b32.xlu0 %v1129, 96
  %v1133 = vpop.permute.xlu0 %1132
  %v1135 = vmul.f32 %v1130, %v1133
  %v1136 = vmul.f32 %v1118, %v1034
  %v1137 = vadd.f32 %v1135, %v1136
  %s1138 = scalar_lea.vmem [#allocation2], 48
  %v1139 = vld [vmem:[%s1138] sm:$0xff]
  %1141 = vrot.lane.b32.xlu0 %v1137, 96
  %v1142 = vpop.permute.xlu0 %1141
  %v1143 = vsel %vm373, %v1142, 0
  %1145 = vmatprep.subr.mxu0 0.0
  %1146 = vmatpush1.msra.mxu0 %v512
  %1147 = vmatprep.subr.mxu0 0.0
  %1148 = vmatpush1.msra.mxu0 %v513
  %1149 = vmatprep.subr.mxu0 0.0
  %1150 = vmatpush1.msra.mxu0 %v514
  %1151 = vmatprep.subr.mxu0 0.0
  %1152 = vmatpush1.msra.mxu0 %v515
  %1153 = vmatprep.subr.mxu0 0.0
  %1154 = vmatpush1.msra.mxu0 0.0
  %1155 = vmatprep.subr.mxu0 0.0
  %1156 = vmatpush1.msra.mxu0 0.0
  %1157 = vmatprep.subr.mxu0 0.0
  %1158 = vmatpush1.msra.mxu0 0.0
  %1159 = vmatprep.subr.mxu0 0.0
  %1160 = vmatpush1.msra.mxu0 0.0
  %1161 = vmatprep.subr.mxu0 0.0
  %1162 = vmatpush1.msra.mxu0 0.0
  %1163 = vmatprep.subr.mxu0 0.0
  %1164 = vmatpush1.msra.mxu0 0.0
  %1165 = vmatprep.subr.mxu0 0.0
  %1166 = vmatpush1.msra.mxu0 0.0
  %1167 = vmatprep.subr.mxu0 0.0
  %1168 = vmatpush1.msra.mxu0 0.0
  %1169 = vmatprep.subr.mxu0 0.0
  %1170 = vmatpush1.msra.mxu0 0.0
  %1171 = vmatprep.subr.mxu0 0.0
  %1172 = vmatpush1.msra.mxu0 0.0
  %1173 = vmatprep.subr.mxu0 0.0
  %1174 = vmatpush1.msra.mxu0 0.0
  %1175 = vmatprep.subr.mxu0 0.0
  %1176 = vmatpush1.msra.mxu0 0.0
  %1177 = vmatprep.subr.mxu0 0.0
  %1178 = vmatpush1.msra.mxu0 0.0
  %1179 = vmatprep.subr.mxu0 0.0
  %1180 = vmatpush1.msra.mxu0 0.0
  %1181 = vmatprep.subr.mxu0 0.0
  %1182 = vmatpush1.msra.mxu0 0.0
  %1183 = vmatprep.subr.mxu0 0.0
  %1184 = vmatpush1.msra.mxu0 0.0
  %1185 = vmatprep.subr.mxu0 0.0
  %1186 = vmatpush1.msra.mxu0 0.0
  %1187 = vmatprep.subr.mxu0 0.0
  %1188 = vmatpush1.msra.mxu0 0.0
  %1189 = vmatprep.subr.mxu0 0.0
  %1190 = vmatpush1.msra.mxu0 0.0
  %1191 = vmatprep.subr.mxu0 0.0
  %1192 = vmatpush1.msra.mxu0 0.0
  %1193 = vmatprep.subr.mxu0 0.0
  %1194 = vmatpush1.msra.mxu0 0.0
  %1195 = vmatprep.subr.mxu0 0.0
  %1196 = vmatpush1.msra.mxu0 0.0
  %1197 = vmatprep.subr.mxu0 0.0
  %1198 = vmatpush1.msra.mxu0 0.0
  %1199 = vmatprep.subr.mxu0 0.0
  %1200 = vmatpush1.msra.mxu0 0.0
  %1201 = vmatprep.subr.mxu0 0.0
  %1202 = vmatpush1.msra.mxu0 0.0
  %1203 = vmatprep.subr.mxu0 0.0
  %1204 = vmatpush1.msra.mxu0 0.0
  %1205 = vmatprep.subr.mxu0 0.0
  %1206 = vmatpush1.msra.mxu0 0.0
  %1207 = vmatprep.subr.mxu0 0.0
  %1208 = vmatpush1.msra.mxu0 0.0
  %1209 = vmatprep.mubr.f32.mxu0 0.0
  %1210 = vmatmul.mubr.f32.gmra.mrb[0].mxu0 %v1143
  %v1211 = vpop.f32.mrb[0].mxu0
  %v1212 = vadd.f32 %v521, %v1211
  %v1213 = vpop.f32.mrb[0].mxu0
  %1214 = vdwg.mxu0
  %v1215 = vadd.f32 %v1139, %v1212
  %v1216 = vxor.u32 %v1215, 2147483648
  %v1217 = vmul.f32 %v1216, 1.442695
  %v1218 = vpow.pop %v1217
  %v1219 = vadd.f32 %v1218, 1.0
  %v1220 = vrcp.pop %v1219
  %v1221 = vmul.f32 1.0, %v1220
  %1223 = vrot.lane.b32.xlu0 %v1212, 64
  %v1224 = vpop.permute.xlu0 %1223
  %v1226 = vmul.f32 %v1221, %v1224
  %1228 = vrot.lane.b32.xlu0 %v1226, 64
  %v1229 = vpop.permute.xlu0 %1228
  %v1231 = vadd.f32 %v1139, %v1229
  %v1232 = vtanh.pop %v1231
  %v1233 = vsub.f32 1.0, %v1221
  %1235 = vrot.lane.b32.xlu0 %v1232, 96
  %v1236 = vpop.permute.xlu0 %1235
  %v1238 = vmul.f32 %v1233, %v1236
  %v1239 = vmul.f32 %v1221, %v1137
  %v1240 = vadd.f32 %v1238, %v1239
  %s1241 = scalar_lea.vmem [#allocation2], 56
  %v1242 = vld [vmem:[%s1241] sm:$0xff]
  %1244 = vrot.lane.b32.xlu0 %v1240, 96
  %v1245 = vpop.permute.xlu0 %1244
  %v1246 = vsel %vm373, %v1245, 0
  %1248 = vmatprep.subr.mxu0 0.0
  %1249 = vmatpush1.msra.mxu0 %v512
  %1250 = vmatprep.subr.mxu0 0.0
  %1251 = vmatpush1.msra.mxu0 %v513
  %1252 = vmatprep.subr.mxu0 0.0
  %1253 = vmatpush1.msra.mxu0 %v514
  %1254 = vmatprep.subr.mxu0 0.0
  %1255 = vmatpush1.msra.mxu0 %v515
  %1256 = vmatprep.subr.mxu0 0.0
  %1257 = vmatpush1.msra.mxu0 0.0
  %1258 = vmatprep.subr.mxu0 0.0
  %1259 = vmatpush1.msra.mxu0 0.0
  %1260 = vmatprep.subr.mxu0 0.0
  %1261 = vmatpush1.msra.mxu0 0.0
  %1262 = vmatprep.subr.mxu0 0.0
  %1263 = vmatpush1.msra.mxu0 0.0
  %1264 = vmatprep.subr.mxu0 0.0
  %1265 = vmatpush1.msra.mxu0 0.0
  %1266 = vmatprep.subr.mxu0 0.0
  %1267 = vmatpush1.msra.mxu0 0.0
  %1268 = vmatprep.subr.mxu0 0.0
  %1269 = vmatpush1.msra.mxu0 0.0
  %1270 = vmatprep.subr.mxu0 0.0
  %1271 = vmatpush1.msra.mxu0 0.0
  %1272 = vmatprep.subr.mxu0 0.0
  %1273 = vmatpush1.msra.mxu0 0.0
  %1274 = vmatprep.subr.mxu0 0.0
  %1275 = vmatpush1.msra.mxu0 0.0
  %1276 = vmatprep.subr.mxu0 0.0
  %1277 = vmatpush1.msra.mxu0 0.0
  %1278 = vmatprep.subr.mxu0 0.0
  %1279 = vmatpush1.msra.mxu0 0.0
  %1280 = vmatprep.subr.mxu0 0.0
  %1281 = vmatpush1.msra.mxu0 0.0
  %1282 = vmatprep.subr.mxu0 0.0
  %1283 = vmatpush1.msra.mxu0 0.0
  %1284 = vmatprep.subr.mxu0 0.0
  %1285 = vmatpush1.msra.mxu0 0.0
  %1286 = vmatprep.subr.mxu0 0.0
  %1287 = vmatpush1.msra.mxu0 0.0
  %1288 = vmatprep.subr.mxu0 0.0
  %1289 = vmatpush1.msra.mxu0 0.0
  %1290 = vmatprep.subr.mxu0 0.0
  %1291 = vmatpush1.msra.mxu0 0.0
  %1292 = vmatprep.subr.mxu0 0.0
  %1293 = vmatpush1.msra.mxu0 0.0
  %1294 = vmatprep.subr.mxu0 0.0
  %1295 = vmatpush1.msra.mxu0 0.0
  %1296 = vmatprep.subr.mxu0 0.0
  %1297 = vmatpush1.msra.mxu0 0.0
  %1298 = vmatprep.subr.mxu0 0.0
  %1299 = vmatpush1.msra.mxu0 0.0
  %1300 = vmatprep.subr.mxu0 0.0
  %1301 = vmatpush1.msra.mxu0 0.0
  %1302 = vmatprep.subr.mxu0 0.0
  %1303 = vmatpush1.msra.mxu0 0.0
  %1304 = vmatprep.subr.mxu0 0.0
  %1305 = vmatpush1.msra.mxu0 0.0
  %1306 = vmatprep.subr.mxu0 0.0
  %1307 = vmatpush1.msra.mxu0 0.0
  %1308 = vmatprep.subr.mxu0 0.0
  %1309 = vmatpush1.msra.mxu0 0.0
  %1310 = vmatprep.subr.mxu0 0.0
  %1311 = vmatpush1.msra.mxu0 0.0
  %1312 = vmatprep.mubr.f32.mxu0 0.0
  %1313 = vmatmul.mubr.f32.gmra.mrb[0].mxu0 %v1246
  %v1314 = vpop.f32.mrb[0].mxu0
  %v1315 = vadd.f32 %v521, %v1314
  %v1316 = vpop.f32.mrb[0].mxu0
  %1317 = vdwg.mxu0
  %v1318 = vadd.f32 %v1242, %v1315
  %v1319 = vxor.u32 %v1318, 2147483648
  %v1320 = vmul.f32 %v1319, 1.442695
  %v1321 = vpow.pop %v1320
  %v1322 = vadd.f32 %v1321, 1.0
  %v1323 = vrcp.pop %v1322
  %v1324 = vmul.f32 1.0, %v1323
  %1326 = vrot.lane.b32.xlu0 %v1315, 64
  %v1327 = vpop.permute.xlu0 %1326
  %v1329 = vmul.f32 %v1324, %v1327
  %1331 = vrot.lane.b32.xlu0 %v1329, 64
  %v1332 = vpop.permute.xlu0 %1331
  %v1334 = vadd.f32 %v1242, %v1332
  %v1335 = vtanh.pop %v1334
  %v1336 = vsub.f32 1.0, %v1324
  %1338 = vrot.lane.b32.xlu0 %v1335, 96
  %v1339 = vpop.permute.xlu0 %1338
  %v1341 = vmul.f32 %v1336, %v1339
  %v1342 = vmul.f32 %v1324, %v1240
  %v1343 = vadd.f32 %v1341, %v1342
  %v1344 = vld [vmem:[%s9] sm:$0xff]
  %v1345 = vld [vmem:[%s9 + $0x8] sm:$0xff]
  %v1346 = vld [vmem:[%s9 + $0x10] sm:$0xff]
  %v1347 = vld [vmem:[%s9 + $0x18] sm:$0xff]
  %v1348 = vld [vmem:[%s11] sm:$0x1]
  %v1350 = vlaneseq
  %v1351 = vshrl.u32 %v1350, 7
  %v1352 = vsub.s32 0, %v1351
  %v1353 = vrot.slane %v1348, %v1352
  %v1355 = vld [vmem:[%s10] sm:$0x1]
  %1357 = vrot.lane.b32.xlu0 %v1343, 96
  %v1358 = vpop.permute.xlu0 %1357
  %v1359 = vsel %vm373, %v1358, 0
  %1361 = vmatprep.subr.mxu0 0.0
  %1362 = vmatpush1.msra.mxu0 %v1344
  %1363 = vmatprep.subr.mxu0 0.0
  %1364 = vmatpush1.msra.mxu0 %v1345
  %1365 = vmatprep.subr.mxu0 0.0
  %1366 = vmatpush1.msra.mxu0 %v1346
  %1367 = vmatprep.subr.mxu0 0.0
  %1368 = vmatpush1.msra.mxu0 %v1347
  %1369 = vmatprep.subr.mxu0 0.0
  %1370 = vmatpush1.msra.mxu0 0.0
  %1371 = vmatprep.subr.mxu0 0.0
  %1372 = vmatpush1.msra.mxu0 0.0
  %1373 = vmatprep.subr.mxu0 0.0
  %1374 = vmatpush1.msra.mxu0 0.0
  %1375 = vmatprep.subr.mxu0 0.0
  %1376 = vmatpush1.msra.mxu0 0.0
  %1377 = vmatprep.subr.mxu0 0.0
  %1378 = vmatpush1.msra.mxu0 0.0
  %1379 = vmatprep.subr.mxu0 0.0
  %1380 = vmatpush1.msra.mxu0 0.0
  %1381 = vmatprep.subr.mxu0 0.0
  %1382 = vmatpush1.msra.mxu0 0.0
  %1383 = vmatprep.subr.mxu0 0.0
  %1384 = vmatpush1.msra.mxu0 0.0
  %1385 = vmatprep.subr.mxu0 0.0
  %1386 = vmatpush1.msra.mxu0 0.0
  %1387 = vmatprep.subr.mxu0 0.0
  %1388 = vmatpush1.msra.mxu0 0.0
  %1389 = vmatprep.subr.mxu0 0.0
  %1390 = vmatpush1.msra.mxu0 0.0
  %1391 = vmatprep.subr.mxu0 0.0
  %1392 = vmatpush1.msra.mxu0 0.0
  %1393 = vmatprep.subr.mxu0 0.0
  %1394 = vmatpush1.msra.mxu0 0.0
  %1395 = vmatprep.subr.mxu0 0.0
  %1396 = vmatpush1.msra.mxu0 0.0
  %1397 = vmatprep.subr.mxu0 0.0
  %1398 = vmatpush1.msra.mxu0 0.0
  %1399 = vmatprep.subr.mxu0 0.0
  %1400 = vmatpush1.msra.mxu0 0.0
  %1401 = vmatprep.subr.mxu0 0.0
  %1402 = vmatpush1.msra.mxu0 0.0
  %1403 = vmatprep.subr.mxu0 0.0
  %1404 = vmatpush1.msra.mxu0 0.0
  %1405 = vmatprep.subr.mxu0 0.0
  %1406 = vmatpush1.msra.mxu0 0.0
  %1407 = vmatprep.subr.mxu0 0.0
  %1408 = vmatpush1.msra.mxu0 0.0
  %1409 = vmatprep.subr.mxu0 0.0
  %1410 = vmatpush1.msra.mxu0 0.0
  %1411 = vmatprep.subr.mxu0 0.0
  %1412 = vmatpush1.msra.mxu0 0.0
  %1413 = vmatprep.subr.mxu0 0.0
  %1414 = vmatpush1.msra.mxu0 0.0
  %1415 = vmatprep.subr.mxu0 0.0
  %1416 = vmatpush1.msra.mxu0 0.0
  %1417 = vmatprep.subr.mxu0 0.0
  %1418 = vmatpush1.msra.mxu0 0.0
  %1419 = vmatprep.subr.mxu0 0.0
  %1420 = vmatpush1.msra.mxu0 0.0
  %1421 = vmatprep.subr.mxu0 0.0
  %1422 = vmatpush1.msra.mxu0 0.0
  %1423 = vmatprep.subr.mxu0 0.0
  %1424 = vmatpush1.msra.mxu0 0.0
  %1425 = vmatprep.mubr.f32.mxu0 0.0
  %1426 = vmatmul.mubr.f32.gmra.mrb[0].mxu0 %v1359
  %v1427 = vpop.f32.mrb[0].mxu0
  %v1428 = vadd.f32 %v1353, %v1427
  %v1429 = vpop.f32.mrb[0].mxu0
  %1430 = vdwg.mxu0
  %v1432 = vlaneseq
  %v1433 = vshrl.u32 %v1432, 7
  %v1434 = vsub.s32 0, %v1433
  %v1435 = vrot.slane %v1355, %v1434
  %v1437 = vadd.f32 %v1435, %v1428
  %v1438 = vxor.u32 %v1437, 2147483648
  %v1439 = vmul.f32 %v1438, 1.442695
  %v1440 = vpow.pop %v1439
  %v1441 = vadd.f32 %v1440, 1.0
  %v1442 = vrcp.pop %v1441
  %v1443 = vmul.f32 1.0, %v1442
  %1445 = vrot.lane.b32.xlu0 %v1428, 64
  %v1446 = vpop.permute.xlu0 %1445
  %v1448 = vmul.f32 %v1443, %v1446
  %1450 = vrot.lane.b32.xlu0 %v1448, 64
  %v1451 = vpop.permute.xlu0 %1450
  %v1453 = vadd.f32 %v1435, %v1451
  %v1454 = vtanh.pop %v1453
  %v1455 = vsub.f32 1.0, %v1443
  %1457 = vrot.lane.b32.xlu0 %v1454, 96
  %v1458 = vpop.permute.xlu0 %1457
  %v1460 = vmul.f32 %v1455, %v1458
  %v1461 = vmul.f32 %v1443, %v1343
  %v1462 = vadd.f32 %v1460, %v1461
  %1464 = vrot.lane.b32.xlu0 %v1462, 96
  %v1465 = vpop.permute.xlu0 %1464
  %1467 = vst.msk [vmem:[#allocation3] sm:$0xff] %vm373, %v1465
  %v1468 = vsel %vm373, %v1465, 0
  %1470 = vmatprep.subr.mxu0 0.0
  %1471 = vmatpush1.msra.mxu0 %v1344
  %1472 = vmatprep.subr.mxu0 0.0
  %1473 = vmatpush1.msra.mxu0 %v1345
  %1474 = vmatprep.subr.mxu0 0.0
  %1475 = vmatpush1.msra.mxu0 %v1346
  %1476 = vmatprep.subr.mxu0 0.0
  %1477 = vmatpush1.msra.mxu0 %v1347
  %1478 = vmatprep.subr.mxu0 0.0
  %1479 = vmatpush1.msra.mxu0 0.0
  %1480 = vmatprep.subr.mxu0 0.0
  %1481 = vmatpush1.msra.mxu0 0.0
  %1482 = vmatprep.subr.mxu0 0.0
  %1483 = vmatpush1.msra.mxu0 0.0
  %1484 = vmatprep.subr.mxu0 0.0
  %1485 = vmatpush1.msra.mxu0 0.0
  %1486 = vmatprep.subr.mxu0 0.0
  %1487 = vmatpush1.msra.mxu0 0.0
  %1488 = vmatprep.subr.mxu0 0.0
  %1489 = vmatpush1.msra.mxu0 0.0
  %1490 = vmatprep.subr.mxu0 0.0
  %1491 = vmatpush1.msra.mxu0 0.0
  %1492 = vmatprep.subr.mxu0 0.0
  %1493 = vmatpush1.msra.mxu0 0.0
  %1494 = vmatprep.subr.mxu0 0.0
  %1495 = vmatpush1.msra.mxu0 0.0
  %1496 = vmatprep.subr.mxu0 0.0
  %1497 = vmatpush1.msra.mxu0 0.0
  %1498 = vmatprep.subr.mxu0 0.0
  %1499 = vmatpush1.msra.mxu0 0.0
  %1500 = vmatprep.subr.mxu0 0.0
  %1501 = vmatpush1.msra.mxu0 0.0
  %1502 = vmatprep.subr.mxu0 0.0
  %1503 = vmatpush1.msra.mxu0 0.0
  %1504 = vmatprep.subr.mxu0 0.0
  %1505 = vmatpush1.msra.mxu0 0.0
  %1506 = vmatprep.subr.mxu0 0.0
  %1507 = vmatpush1.msra.mxu0 0.0
  %1508 = vmatprep.subr.mxu0 0.0
  %1509 = vmatpush1.msra.mxu0 0.0
  %1510 = vmatprep.subr.mxu0 0.0
  %1511 = vmatpush1.msra.mxu0 0.0
  %1512 = vmatprep.subr.mxu0 0.0
  %1513 = vmatpush1.msra.mxu0 0.0
  %1514 = vmatprep.subr.mxu0 0.0
  %1515 = vmatpush1.msra.mxu0 0.0
  %1516 = vmatprep.subr.mxu0 0.0
  %1517 = vmatpush1.msra.mxu0 0.0
  %1518 = vmatprep.subr.mxu0 0.0
  %1519 = vmatpush1.msra.mxu0 0.0
  %1520 = vmatprep.subr.mxu0 0.0
  %1521 = vmatpush1.msra.mxu0 0.0
  %1522 = vmatprep.subr.mxu0 0.0
  %1523 = vmatpush1.msra.mxu0 0.0
  %1524 = vmatprep.subr.mxu0 0.0
  %1525 = vmatpush1.msra.mxu0 0.0
  %1526 = vmatprep.subr.mxu0 0.0
  %1527 = vmatpush1.msra.mxu0 0.0
  %1528 = vmatprep.subr.mxu0 0.0
  %1529 = vmatpush1.msra.mxu0 0.0
  %1530 = vmatprep.subr.mxu0 0.0
  %1531 = vmatpush1.msra.mxu0 0.0
  %1532 = vmatprep.subr.mxu0 0.0
  %1533 = vmatpush1.msra.mxu0 0.0
  %1534 = vmatprep.mubr.f32.mxu0 0.0
  %1535 = vmatmul.mubr.f32.gmra.mrb[0].mxu0 %v1468
  %v1536 = vpop.f32.mrb[0].mxu0
  %v1537 = vadd.f32 %v1353, %v1536
  %v1538 = vpop.f32.mrb[0].mxu0
  %1539 = vdwg.mxu0
  %v1540 = vadd.f32 %v1435, %v1537
  %v1541 = vxor.u32 %v1540, 2147483648
  %v1542 = vmul.f32 %v1541, 1.442695
  %v1543 = vpow.pop %v1542
  %v1544 = vadd.f32 %v1543, 1.0
  %v1545 = vrcp.pop %v1544
  %v1546 = vmul.f32 1.0, %v1545
  %1548 = vrot.lane.b32.xlu0 %v1537, 64
  %v1549 = vpop.permute.xlu0 %1548
  %v1551 = vmul.f32 %v1546, %v1549
  %1553 = vrot.lane.b32.xlu0 %v1551, 64
  %v1554 = vpop.permute.xlu0 %1553
  %v1556 = vadd.f32 %v1435, %v1554
  %v1557 = vtanh.pop %v1556
  %v1558 = vsub.f32 1.0, %v1546
  %1560 = vrot.lane.b32.xlu0 %v1557, 96
  %v1561 = vpop.permute.xlu0 %1560
  %v1563 = vmul.f32 %v1558, %v1561
  %v1564 = vmul.f32 %v1546, %v1462
  %v1565 = vadd.f32 %v1563, %v1564
  %1567 = vrot.lane.b32.xlu0 %v1565, 96
  %v1568 = vpop.permute.xlu0 %1567
  %s1570 = scalar_lea.vmem [#allocation3], 8
  %1571 = vst.msk [vmem:[%s1570] sm:$0xff] %vm373, %v1568
  %v1572 = vsel %vm373, %v1568, 0
  %1574 = vmatprep.subr.mxu0 0.0
  %1575 = vmatpush1.msra.mxu0 %v1344
  %1576 = vmatprep.subr.mxu0 0.0
  %1577 = vmatpush1.msra.mxu0 %v1345
  %1578 = vmatprep.subr.mxu0 0.0
  %1579 = vmatpush1.msra.mxu0 %v1346
  %1580 = vmatprep.subr.mxu0 0.0
  %1581 = vmatpush1.msra.mxu0 %v1347
  %1582 = vmatprep.subr.mxu0 0.0
  %1583 = vmatpush1.msra.mxu0 0.0
  %1584 = vmatprep.subr.mxu0 0.0
  %1585 = vmatpush1.msra.mxu0 0.0
  %1586 = vmatprep.subr.mxu0 0.0
  %1587 = vmatpush1.msra.mxu0 0.0
  %1588 = vmatprep.subr.mxu0 0.0
  %1589 = vmatpush1.msra.mxu0 0.0
  %1590 = vmatprep.subr.mxu0 0.0
  %1591 = vmatpush1.msra.mxu0 0.0
  %1592 = vmatprep.subr.mxu0 0.0
  %1593 = vmatpush1.msra.mxu0 0.0
  %1594 = vmatprep.subr.mxu0 0.0
  %1595 = vmatpush1.msra.mxu0 0.0
  %1596 = vmatprep.subr.mxu0 0.0
  %1597 = vmatpush1.msra.mxu0 0.0
  %1598 = vmatprep.subr.mxu0 0.0
  %1599 = vmatpush1.msra.mxu0 0.0
  %1600 = vmatprep.subr.mxu0 0.0
  %1601 = vmatpush1.msra.mxu0 0.0
  %1602 = vmatprep.subr.mxu0 0.0
  %1603 = vmatpush1.msra.mxu0 0.0
  %1604 = vmatprep.subr.mxu0 0.0
  %1605 = vmatpush1.msra.mxu0 0.0
  %1606 = vmatprep.subr.mxu0 0.0
  %1607 = vmatpush1.msra.mxu0 0.0
  %1608 = vmatprep.subr.mxu0 0.0
  %1609 = vmatpush1.msra.mxu0 0.0
  %1610 = vmatprep.subr.mxu0 0.0
  %1611 = vmatpush1.msra.mxu0 0.0
  %1612 = vmatprep.subr.mxu0 0.0
  %1613 = vmatpush1.msra.mxu0 0.0
  %1614 = vmatprep.subr.mxu0 0.0
  %1615 = vmatpush1.msra.mxu0 0.0
  %1616 = vmatprep.subr.mxu0 0.0
  %1617 = vmatpush1.msra.mxu0 0.0
  %1618 = vmatprep.subr.mxu0 0.0
  %1619 = vmatpush1.msra.mxu0 0.0
  %1620 = vmatprep.subr.mxu0 0.0
  %1621 = vmatpush1.msra.mxu0 0.0
  %1622 = vmatprep.subr.mxu0 0.0
  %1623 = vmatpush1.msra.mxu0 0.0
  %1624 = vmatprep.subr.mxu0 0.0
  %1625 = vmatpush1.msra.mxu0 0.0
  %1626 = vmatprep.subr.mxu0 0.0
  %1627 = vmatpush1.msra.mxu0 0.0
  %1628 = vmatprep.subr.mxu0 0.0
  %1629 = vmatpush1.msra.mxu0 0.0
  %1630 = vmatprep.subr.mxu0 0.0
  %1631 = vmatpush1.msra.mxu0 0.0
  %1632 = vmatprep.subr.mxu0 0.0
  %1633 = vmatpush1.msra.mxu0 0.0
  %1634 = vmatprep.subr.mxu0 0.0
  %1635 = vmatpush1.msra.mxu0 0.0
  %1636 = vmatprep.subr.mxu0 0.0
  %1637 = vmatpush1.msra.mxu0 0.0
  %1638 = vmatprep.mubr.f32.mxu0 0.0
  %1639 = vmatmul.mubr.f32.gmra.mrb[0].mxu0 %v1572
  %v1640 = vpop.f32.mrb[0].mxu0
  %v1641 = vadd.f32 %v1353, %v1640
  %v1642 = vpop.f32.mrb[0].mxu0
  %1643 = vdwg.mxu0
  %v1644 = vadd.f32 %v1435, %v1641
  %v1645 = vxor.u32 %v1644, 2147483648
  %v1646 = vmul.f32 %v1645, 1.442695
  %v1647 = vpow.pop %v1646
  %v1648 = vadd.f32 %v1647, 1.0
  %v1649 = vrcp.pop %v1648
  %v1650 = vmul.f32 1.0, %v1649
  %1652 = vrot.lane.b32.xlu0 %v1641, 64
  %v1653 = vpop.permute.xlu0 %1652
  %v1655 = vmul.f32 %v1650, %v1653
  %1657 = vrot.lane.b32.xlu0 %v1655, 64
  %v1658 = vpop.permute.xlu0 %1657
  %v1660 = vadd.f32 %v1435, %v1658
  %v1661 = vtanh.pop %v1660
  %v1662 = vsub.f32 1.0, %v1650
  %1664 = vrot.lane.b32.xlu0 %v1661, 96
  %v1665 = vpop.permute.xlu0 %1664
  %v1667 = vmul.f32 %v1662, %v1665
  %v1668 = vmul.f32 %v1650, %v1565
  %v1669 = vadd.f32 %v1667, %v1668
  %1671 = vrot.lane.b32.xlu0 %v1669, 96
  %v1672 = vpop.permute.xlu0 %1671
  %s1674 = scalar_lea.vmem [#allocation3], 16
  %1675 = vst.msk [vmem:[%s1674] sm:$0xff] %vm373, %v1672
  %v1676 = vld [vmem:[#allocation3] sm:$0xff]
  %v1677 = vld [vmem:[#allocation3 + $0x8] sm:$0xff]
  %v1678 = vld [vmem:[#allocation3 + $0x10] sm:$0xff]
  %v1679 = vld [vmem:[%s12] sm:$0xff]
  %v1680 = vld [vmem:[%s12 + $0x8] sm:$0xff]
  %v1681 = vld [vmem:[%s12 + $0x10] sm:$0xff]
  %v1682 = vld [vmem:[%s12 + $0x18] sm:$0xff]
  %v1683 = vld [vmem:[%s13] sm:$0x1]
  %v1685 = vlaneseq
  %v1686 = vshrl.u32 %v1685, 7
  %v1687 = vsub.s32 0, %v1686
  %v1688 = vrot.slane %v1683, %v1687
  %v1691 = vsel %vm373, %v1676, 0
  %v1694 = vsel %vm373, %v1677, 0
  %v1697 = vsel %vm373, %v1678, 0
  %1699 = vmatprep.subr.mxu0 0.0
  %1700 = vmatpush1.msra.mxu0 %v1679
  %1701 = vmatprep.subr.mxu0 0.0
  %1702 = vmatpush1.msra.mxu0 %v1680
  %1703 = vmatprep.subr.mxu0 0.0
  %1704 = vmatpush1.msra.mxu0 %v1681
  %1705 = vmatprep.subr.mxu0 0.0
  %1706 = vmatpush1.msra.mxu0 %v1682
  %1707 = vmatprep.subr.mxu0 0.0
  %1708 = vmatpush1.msra.mxu0 0.0
  %1709 = vmatprep.subr.mxu0 0.0
  %1710 = vmatpush1.msra.mxu0 0.0
  %1711 = vmatprep.subr.mxu0 0.0
  %1712 = vmatpush1.msra.mxu0 0.0
  %1713 = vmatprep.subr.mxu0 0.0
  %1714 = vmatpush1.msra.mxu0 0.0
  %1715 = vmatprep.subr.mxu0 0.0
  %1716 = vmatpush1.msra.mxu0 0.0
  %1717 = vmatprep.subr.mxu0 0.0
  %1718 = vmatpush1.msra.mxu0 0.0
  %1719 = vmatprep.subr.mxu0 0.0
  %1720 = vmatpush1.msra.mxu0 0.0
  %1721 = vmatprep.subr.mxu0 0.0
  %1722 = vmatpush1.msra.mxu0 0.0
  %1723 = vmatprep.subr.mxu0 0.0
  %1724 = vmatpush1.msra.mxu0 0.0
  %1725 = vmatprep.subr.mxu0 0.0
  %1726 = vmatpush1.msra.mxu0 0.0
  %1727 = vmatprep.subr.mxu0 0.0
  %1728 = vmatpush1.msra.mxu0 0.0
  %1729 = vmatprep.subr.mxu0 0.0
  %1730 = vmatpush1.msra.mxu0 0.0
  %1731 = vmatprep.subr.mxu0 0.0
  %1732 = vmatpush1.msra.mxu0 0.0
  %1733 = vmatprep.subr.mxu0 0.0
  %1734 = vmatpush1.msra.mxu0 0.0
  %1735 = vmatprep.subr.mxu0 0.0
  %1736 = vmatpush1.msra.mxu0 0.0
  %1737 = vmatprep.subr.mxu0 0.0
  %1738 = vmatpush1.msra.mxu0 0.0
  %1739 = vmatprep.subr.mxu0 0.0
  %1740 = vmatpush1.msra.mxu0 0.0
  %1741 = vmatprep.subr.mxu0 0.0
  %1742 = vmatpush1.msra.mxu0 0.0
  %1743 = vmatprep.subr.mxu0 0.0
  %1744 = vmatpush1.msra.mxu0 0.0
  %1745 = vmatprep.subr.mxu0 0.0
  %1746 = vmatpush1.msra.mxu0 0.0
  %1747 = vmatprep.subr.mxu0 0.0
  %1748 = vmatpush1.msra.mxu0 0.0
  %1749 = vmatprep.subr.mxu0 0.0
  %1750 = vmatpush1.msra.mxu0 0.0
  %1751 = vmatprep.subr.mxu0 0.0
  %1752 = vmatpush1.msra.mxu0 0.0
  %1753 = vmatprep.subr.mxu0 0.0
  %1754 = vmatpush1.msra.mxu0 0.0
  %1755 = vmatprep.subr.mxu0 0.0
  %1756 = vmatpush1.msra.mxu0 0.0
  %1757 = vmatprep.subr.mxu0 0.0
  %1758 = vmatpush1.msra.mxu0 0.0
  %1759 = vmatprep.subr.mxu0 0.0
  %1760 = vmatpush1.msra.mxu0 0.0
  %1761 = vmatprep.subr.mxu0 0.0
  %1762 = vmatpush1.msra.mxu0 0.0
  %1763 = vmatprep.mubr.f32.mxu0 0.0
  %1764 = vmatmul.mubr.f32.gmra.mrb[0].mxu0 %v1691
  %v1765 = vpop.f32.mrb[0].mxu0
  %v1766 = vadd.f32 %v1688, %v1765
  %v1767 = vpop.f32.mrb[0].mxu0
  %1768 = vmatprep.mubr.f32.mxu0 0.0
  %1769 = vmatmul.mubr.f32.gmra.mrb[0].mxu0 %v1694
  %v1770 = vpop.f32.mrb[0].mxu0
  %v1771 = vadd.f32 %v1688, %v1770
  %v1772 = vpop.f32.mrb[0].mxu0
  %1773 = vmatprep.mubr.f32.mxu0 0.0
  %1774 = vmatmul.mubr.f32.gmra.mrb[0].mxu0 %v1697
  %v1775 = vpop.f32.mrb[0].mxu0
  %v1776 = vadd.f32 %v1688, %v1775
  %v1777 = vpop.f32.mrb[0].mxu0
  %1778 = vdwg.mxu0
  %v1779 = vmax.f32 %v1766, 0.0
  %v1780 = vmax.f32 %v1771, 0.0
  %v1781 = vmax.f32 %v1776, 0.0
  %v1782 = vld [vmem:[%s14] sm:$0xff]
  %v1783 = vld [vmem:[%s14 + $0x8] sm:$0xff]
  %v1784 = vld [vmem:[%s14 + $0x10] sm:$0xff]
  %v1785 = vld [vmem:[%s14 + $0x18] sm:$0xff]
  %v1786 = vld [vmem:[%s15] sm:$0x1]
  %v1788 = vlaneseq
  %v1789 = vshrl.u32 %v1788, 7
  %v1790 = vsub.s32 0, %v1789
  %v1791 = vrot.slane %v1786, %v1790
  %v1794 = vsel %vm373, %v1779, 0
  %v1797 = vsel %vm373, %v1780, 0
  %v1800 = vsel %vm373, %v1781, 0
  %1802 = vmatprep.subr.mxu0 0.0
  %1803 = vmatpush1.msra.mxu0 %v1782
  %1804 = vmatprep.subr.mxu0 0.0
  %1805 = vmatpush1.msra.mxu0 %v1783
  %1806 = vmatprep.subr.mxu0 0.0
  %1807 = vmatpush1.msra.mxu0 %v1784
  %1808 = vmatprep.subr.mxu0 0.0
  %1809 = vmatpush1.msra.mxu0 %v1785
  %1810 = vmatprep.subr.mxu0 0.0
  %1811 = vmatpush1.msra.mxu0 0.0
  %1812 = vmatprep.subr.mxu0 0.0
  %1813 = vmatpush1.msra.mxu0 0.0
  %1814 = vmatprep.subr.mxu0 0.0
  %1815 = vmatpush1.msra.mxu0 0.0
  %1816 = vmatprep.subr.mxu0 0.0
  %1817 = vmatpush1.msra.mxu0 0.0
  %1818 = vmatprep.subr.mxu0 0.0
  %1819 = vmatpush1.msra.mxu0 0.0
  %1820 = vmatprep.subr.mxu0 0.0
  %1821 = vmatpush1.msra.mxu0 0.0
  %1822 = vmatprep.subr.mxu0 0.0
  %1823 = vmatpush1.msra.mxu0 0.0
  %1824 = vmatprep.subr.mxu0 0.0
  %1825 = vmatpush1.msra.mxu0 0.0
  %1826 = vmatprep.subr.mxu0 0.0
  %1827 = vmatpush1.msra.mxu0 0.0
  %1828 = vmatprep.subr.mxu0 0.0
  %1829 = vmatpush1.msra.mxu0 0.0
  %1830 = vmatprep.subr.mxu0 0.0
  %1831 = vmatpush1.msra.mxu0 0.0
  %1832 = vmatprep.subr.mxu0 0.0
  %1833 = vmatpush1.msra.mxu0 0.0
  %1834 = vmatprep.subr.mxu0 0.0
  %1835 = vmatpush1.msra.mxu0 0.0
  %1836 = vmatprep.subr.mxu0 0.0
  %1837 = vmatpush1.msra.mxu0 0.0
  %1838 = vmatprep.subr.mxu0 0.0
  %1839 = vmatpush1.msra.mxu0 0.0
  %1840 = vmatprep.subr.mxu0 0.0
  %1841 = vmatpush1.msra.mxu0 0.0
  %1842 = vmatprep.subr.mxu0 0.0
  %1843 = vmatpush1.msra.mxu0 0.0
  %1844 = vmatprep.subr.mxu0 0.0
  %1845 = vmatpush1.msra.mxu0 0.0
  %1846 = vmatprep.subr.mxu0 0.0
  %1847 = vmatpush1.msra.mxu0 0.0
  %1848 = vmatprep.subr.mxu0 0.0
  %1849 = vmatpush1.msra.mxu0 0.0
  %1850 = vmatprep.subr.mxu0 0.0
  %1851 = vmatpush1.msra.mxu0 0.0
  %1852 = vmatprep.subr.mxu0 0.0
  %1853 = vmatpush1.msra.mxu0 0.0
  %1854 = vmatprep.subr.mxu0 0.0
  %1855 = vmatpush1.msra.mxu0 0.0
  %1856 = vmatprep.subr.mxu0 0.0
  %1857 = vmatpush1.msra.mxu0 0.0
  %1858 = vmatprep.subr.mxu0 0.0
  %1859 = vmatpush1.msra.mxu0 0.0
  %1860 = vmatprep.subr.mxu0 0.0
  %1861 = vmatpush1.msra.mxu0 0.0
  %1862 = vmatprep.subr.mxu0 0.0
  %1863 = vmatpush1.msra.mxu0 0.0
  %1864 = vmatprep.subr.mxu0 0.0
  %1865 = vmatpush1.msra.mxu0 0.0
  %1866 = vmatprep.mubr.f32.mxu0 0.0
  %1867 = vmatmul.mubr.f32.gmra.mrb[0].mxu0 %v1794
  %v1868 = vpop.f32.mrb[0].mxu0
  %v1869 = vadd.f32 %v1791, %v1868
  %v1870 = vpop.f32.mrb[0].mxu0
  %1871 = vmatprep.mubr.f32.mxu0 0.0
  %1872 = vmatmul.mubr.f32.gmra.mrb[0].mxu0 %v1797
  %v1873 = vpop.f32.mrb[0].mxu0
  %v1874 = vadd.f32 %v1791, %v1873
  %v1875 = vpop.f32.mrb[0].mxu0
  %1876 = vmatprep.mubr.f32.mxu0 0.0
  %1877 = vmatmul.mubr.f32.gmra.mrb[0].mxu0 %v1800
  %v1878 = vpop.f32.mrb[0].mxu0
  %v1879 = vadd.f32 %v1791, %v1878
  %v1880 = vpop.f32.mrb[0].mxu0
  %1881 = vdwg.mxu0
  %vm1882 = vcmask 15360
  %1883 = vst.msk [vmem:[%s16] sm:$0xff] %vm1882, %v1869
  %1884 = vst.msk [vmem:[%s16 + $0x8] sm:$0xff] %vm1882, %v1874
  %1885 = vst.msk [vmem:[%s16 + $0x10] sm:$0xff] %vm1882, %v1879
  // Predicated region
  $region66: #{tpu_custom_call.1} parent=0 // pred_check
    _
  $region67: #{tpu_custom_call.1} parent=0 // pred_check_branch
    %1887 = sbr.rel (0) target = $region69
  $region68: #{tpu_custom_call.1} parent=0 // pred_region
    _
  $region69: #{tpu_custom_call.1} parent=0 // pred_fallthru
    _
  // Predicated region
  $region70: #{tpu_custom_call.1} parent=0 // pred_check
    _
  $region71: #{tpu_custom_call.1} parent=0 // pred_check_branch
    %1889 = sbr.rel (0) target = $region73
  $region72: #{tpu_custom_call.1} parent=0 // pred_region
    _
  $region73: #{tpu_custom_call.1} parent=0 // pred_fallthru
    _

</llo_original>
